<compile_context>
chip_gen: v6e
topology: v6e:2x2x1
jax: 0.10.0
libtpu: 0.0.40
codegen_flags: <defaults>
</compile_context>

<pallas_src>
import functools

import jax
import jax.numpy as jnp
from jax.experimental import pallas as pl
from jax.experimental.pallas import tpu as pltpu


def _bilstm_recurrence_kernel(gx_ref, whh_ref, out_ref, h_scr, c_scr):
    """Recurrent part of a bidirectional LSTM (one direction x one time-chunk).

    gx_ref : (Tc, B, 4H)      precomputed x_t @ W_ih^T + (b_ih + b_hh)
    whh_ref: (H, 4H)          hidden->gates weights (transposed) for this dir
    out_ref: (Tc, B, H)  f32  per-step hidden states for this dir / chunk
    h_scr  : (B, H) f32       hidden state carried across time-chunks
    c_scr  : (B, H) f32       cell state carried across time-chunks

    Grid = (direction, time_chunk); the time-chunk axis is the fast, serial
    ("arbitrary") axis.  The backward direction (d == 1) walks chunks in
    reverse via the index_maps and walks steps inside the chunk in reverse
    via `lt` below.
    """
    d = pl.program_id(0)       # 0 = forward, 1 = backward
    tc = pl.program_id(1)      # time-chunk index (grid order)

    @pl.when(tc == 0)
    def _():
        # rnn_state is None in the PyTorch module -> zero initial (h, c).
        h_scr[...] = jnp.zeros_like(h_scr)
        c_scr[...] = jnp.zeros_like(c_scr)

    whh = whh_ref[...]                       # (H, 4H), loaded once per chunk
    Tc = gx_ref.shape[0]
    H = h_scr.shape[-1]

    base = d * (Tc - 1)                      # 0 fwd, Tc-1 bwd
    sign = 1 - 2 * d                         # +1 fwd, -1 bwd

    def step(i, carry):
        h, c = carry
        lt = base + sign * i                 # local time index inside chunk
        # Serial critical path: one small MXU dot per step, everything else
        # is VPU/EUP work on (B, 4H)/(B, H) tiles.
        gates = gx_ref[lt] + jnp.dot(h.astype(whh.dtype), whh,
                                     preferred_element_type=jnp.float32)
        i_g = jax.nn.sigmoid(gates[:, 0 * H:1 * H])
        f_g = jax.nn.sigmoid(gates[:, 1 * H:2 * H])
        g_g = jnp.tanh(gates[:, 2 * H:3 * H])
        o_g = jax.nn.sigmoid(gates[:, 3 * H:4 * H])
        c_new = f_g * c + i_g * g_g
        h_new = o_g * jnp.tanh(c_new)
        out_ref[lt] = h_new.astype(out_ref.dtype)
        return (h_new, c_new)

    h, c = jax.lax.fori_loop(0, Tc, step, (h_scr[...], c_scr[...]),
                             unroll=True)
    h_scr[...] = h
    c_scr[...] = c


def _pick_time_chunk(T, target):
    """Largest divisor of T that is <= target (so chunks tile T exactly)."""
    tc = 1
    for cand in range(1, min(T, target) + 1):
        if T % cand == 0:
            tc = cand
    return tc


@functools.partial(jax.jit, static_argnames=("time_chunk", "compute_dtype"))
def base_model_forward(params, tokens, *, time_chunk=32,
                       compute_dtype=jnp.float32):
    """Forward pass of BaseModel: embedding -> (eval) dropout -> biLSTM.

    tokens : (B, T) int32
    returns (B, T, hidden_size) float32
    """
    # Embedding gather directly in time-major order (no (B,T,E) transpose).
    x_tbe = params["embedding"][tokens.T]                   # (T, B, E)
    # Dropout in eval mode is identity.
    T, B, E = x_tbe.shape

    # Stack per-direction parameters: dir 0 = forward, dir 1 = backward.
    wih = jnp.stack([params["wih_f"], params["wih_b"]])     # (2, 4H, E)
    whh = jnp.stack([params["whh_f"], params["whh_b"]])     # (2, 4H, H)
    bias = jnp.stack([params["bih_f"] + params["bhh_f"],
                      params["bih_b"] + params["bhh_b"]])   # (2, 4H)
    H = whh.shape[-1]

    # Hoisted input projection: no serial dependence, so do it as one large
    # batched matmul (f32 accumulation) off the recurrent critical path, with
    # the bias folded in (not re-added every step inside the kernel).
    gx = jnp.einsum("tbe,dge->dtbg",
                    x_tbe.astype(compute_dtype), wih.astype(compute_dtype),
                    preferred_element_type=jnp.float32)
    gx = gx + bias[:, None, None, :].astype(jnp.float32)    # (2, T, B, 4H)
    # On the bf16 path, store the big gate slab in bf16: halves the HBM
    # write+read traffic of the (2, T, B, 4H) intermediate.  The in-kernel
    # add promotes back to f32 (h/c state and accumulation stay f32).
    gx = gx.astype(compute_dtype)

    whh_t = jnp.transpose(whh, (0, 2, 1)).astype(compute_dtype)  # (2, H, 4H)

    Tc = _pick_time_chunk(T, time_chunk)
    nT = T // Tc

    def _tsel(d, t):
        # forward: chunk t; backward: reversed chunk order (no [::-1] copies,
        # pure DMA addressing).
        return t + d * (nT - 1 - 2 * t)

    out = pl.pallas_call(
        _bilstm_recurrence_kernel,
        out_shape=jax.ShapeDtypeStruct((2, T, B, H), jnp.float32),
        grid_spec=pltpu.PrefetchScalarGridSpec(
            num_scalar_prefetch=0,
            grid=(2, nT),
            in_specs=[
                # Precomputed input-projection gates for this direction/chunk.
                pl.BlockSpec((None, Tc, B, 4 * H),
                             lambda d, t: (d, _tsel(d, t), 0, 0)),
                # Hidden->gates weights for this direction (constant over t,
                # so Pallas skips the re-DMA across time chunks).
                pl.BlockSpec((None, H, 4 * H), lambda d, t: (d, 0, 0)),
            ],
            out_specs=pl.BlockSpec((None, Tc, B, H),
                                   lambda d, t: (d, _tsel(d, t), 0, 0)),
            scratch_shapes=[
                pltpu.VMEM((B, H), jnp.float32),   # h state (carried)
                pltpu.VMEM((B, H), jnp.float32),   # c state (carried)
            ],
        ),
        compiler_params=pltpu.CompilerParams(
            # direction axis is independent (megacore split);
            # time-chunk axis carries the recurrence (sequential).
            dimension_semantics=("parallel", "arbitrary"),
        ),
    )(gx, whh_t)                                            # (2, T, B, H)

    # (2, T, B, H) -> (B, T, 2, H) -> (B, T, 2H): the forward||backward concat
    # is free; only one transpose of the final output remains.
    return jnp.transpose(out, (2, 1, 0, 3)).reshape(B, T, 2 * H)


def init_params(key, vocab_size, embedding_size, hidden_size):
    """Deterministic parameter init mirroring the PyTorch module's shapes."""
    assert hidden_size % 2 == 0
    h_dir = hidden_size // 2
    k = 1.0 / jnp.sqrt(jnp.float32(h_dir))
    keys = jax.random.split(key, 9)

    def u(kk, shape):
        return jax.random.uniform(kk, shape, jnp.float32, -k, k)

    params = {
        "embedding": jax.random.normal(keys[0], (vocab_size, embedding_size),
                                       jnp.float32),
        # forward direction
        "wih_f": u(keys[1], (4 * h_dir, embedding_size)),
        "whh_f": u(keys[2], (4 * h_dir, h_dir)),
        "bih_f": u(keys[3], (4 * h_dir,)),
        "bhh_f": u(keys[4], (4 * h_dir,)),
        # backward direction
        "wih_b": u(keys[5], (4 * h_dir, embedding_size)),
        "whh_b": u(keys[6], (4 * h_dir, h_dir)),
        "bih_b": u(keys[7], (4 * h_dir,)),
        "bhh_b": u(keys[8], (4 * h_dir,)),
    }
    return params


def _reference_forward(params, tokens):
    """Pure-JAX reference (lax.scan) for correctness checking."""
    embedded = params["embedding"][tokens]
    x_tbe = jnp.transpose(embedded, (1, 0, 2))
    B = tokens.shape[0]

    def run_dir(x, wih, whh, bih, bhh):
        H = whh.shape[1]

        def step(carry, x_t):
            h, c = carry
            gates = x_t @ wih.T + h @ whh.T + bih + bhh
            i_g = jax.nn.sigmoid(gates[:, 0 * H:1 * H])
            f_g = jax.nn.sigmoid(gates[:, 1 * H:2 * H])
            g_g = jnp.tanh(gates[:, 2 * H:3 * H])
            o_g = jax.nn.sigmoid(gates[:, 3 * H:4 * H])
            c_new = f_g * c + i_g * g_g
            h_new = o_g * jnp.tanh(c_new)
            return (h_new, c_new), h_new

        h0 = jnp.zeros((B, H), jnp.float32)
        c0 = jnp.zeros((B, H), jnp.float32)
        _, ys = jax.lax.scan(step, (h0, c0), x)
        return ys

    out_f = run_dir(x_tbe, params["wih_f"], params["whh_f"],
                    params["bih_f"], params["bhh_f"])
    out_b = run_dir(x_tbe[::-1], params["wih_b"], params["whh_b"],
                    params["bih_b"], params["bhh_b"])[::-1]
    out = jnp.concatenate([out_f, out_b], axis=-1)
    return jnp.transpose(out, (1, 0, 2))


if __name__ == "__main__":
    # Small, deterministic example shapes.
    vocab_size = 50
    embedding_size = 16
    hidden_size = 32     # 16 per direction
    batch = 2
    seq = 8

    key = jax.random.PRNGKey(0)
    pkey, tkey = jax.random.split(key)
    params = init_params(pkey, vocab_size, embedding_size, hidden_size)
    tokens = jax.random.randint(tkey, (batch, seq), 0, vocab_size, jnp.int32)

    ref = jax.block_until_ready(_reference_forward(params, tokens))

    # f32 compute path.  Tolerance is slightly looser than exact-f32 because
    # the hoisted batched input projection may use a different matmul
    # precision/ordering than the per-step reference; structural bugs would
    # show up as O(0.1)+ errors.
    out = jax.block_until_ready(base_model_forward(params, tokens))
    assert out.shape == (batch, seq, hidden_size), out.shape
    assert jnp.allclose(out, ref, atol=5e-3, rtol=5e-3), (
        float(jnp.max(jnp.abs(out - ref))))

    # bf16 matmul + bf16 gx-slab path (v6e/v7x MXU), f32 accumulation and
    # f32 cell/hidden state.  Looser tolerance for bf16 rounding of the
    # pre-activations.
    out_bf16 = jax.block_until_ready(
        base_model_forward(params, tokens, compute_dtype=jnp.bfloat16))
    assert jnp.allclose(out_bf16, ref, atol=7.5e-2, rtol=5e-2), (
        float(jnp.max(jnp.abs(out_bf16 - ref))))

    print("KERNEL_OK")
</pallas_src>

<mosaic_0001>
module attributes {stable_mosaic.version = 11 : i64} {
  func.func @_bilstm_recurrence_kernel(%arg0: i32, %arg1: i32, %arg2: memref<1x8x2x64xf32, #tpu.memory_space<vmem>>, %arg3: memref<1x16x64xf32, #tpu.memory_space<vmem>>, %arg4: memref<1x8x2x16xf32, #tpu.memory_space<vmem>>, %arg5: memref<2x16xf32, #tpu.memory_space<vmem>>, %arg6: memref<2x16xf32, #tpu.memory_space<vmem>>) attributes {dimension_semantics = [#tpu.dimension_semantics<parallel>, #tpu.dimension_semantics<arbitrary>], iteration_bounds = array<i64: 2, 1>, scalar_prefetch = 0 : i64, scratch_operands = 2 : i64, tpu.core_type = #tpu.core_type<tc>, window_params = [{transform_indices = @transform_0, window_bounds = array<i64: 1, 8, 2, 64>}, {transform_indices = @transform_1, window_bounds = array<i64: 1, 16, 64>}, {transform_indices = @transform_2, window_bounds = array<i64: 1, 8, 2, 16>}]} {
    %c0_i32 = arith.constant 0 : i32
    %0 = arith.cmpi eq, %arg1, %c0_i32 : i32
    %1 = arith.extui %0 : i1 to i32
    %c0_i32_0 = arith.constant 0 : i32
    %2 = arith.cmpi ne, %1, %c0_i32_0 : i32
    scf.if %2 {
      %cst_94 = arith.constant 0.000000e+00 : f32
      %300 = vector.broadcast %cst_94 : f32 to vector<2x16xf32>
      %c0_95 = arith.constant 0 : index
      %c0_96 = arith.constant 0 : index
      %301 = vector.load %arg5[%c0_95, %c0_96] : memref<2x16xf32, #tpu.memory_space<vmem>>, vector<2x16xf32>
      tpu.vector_store %arg5[%c0_95, %c0_96], %300 {strides = array<i32>} : memref<2x16xf32, #tpu.memory_space<vmem>>, vector<2x16xf32>,
      %cst_97 = arith.constant 0.000000e+00 : f32
      %302 = vector.broadcast %cst_97 : f32 to vector<2x16xf32>
      %c0_98 = arith.constant 0 : index
      %c0_99 = arith.constant 0 : index
      %303 = vector.load %arg6[%c0_98, %c0_99] : memref<2x16xf32, #tpu.memory_space<vmem>>, vector<2x16xf32>
      tpu.vector_store %arg6[%c0_98, %c0_99], %302 {strides = array<i32>} : memref<2x16xf32, #tpu.memory_space<vmem>>, vector<2x16xf32>,
    } else {
    }
    %c0 = arith.constant 0 : index
    %c0_1 = arith.constant 0 : index
    %c0_2 = arith.constant 0 : index
    %3 = vector.load %arg3[%c0, %c0_1, %c0_2] : memref<1x16x64xf32, #tpu.memory_space<vmem>>, vector<1x16x64xf32>
    %4 = vector.shape_cast %3 : vector<1x16x64xf32> to vector<16x64xf32>
    %c7_i32 = arith.constant 7 : i32
    %5 = arith.muli %arg0, %c7_i32 : i32
    %c2_i32 = arith.constant 2 : i32
    %6 = arith.muli %c2_i32, %arg0 : i32
    %c1_i32 = arith.constant 1 : i32
    %7 = arith.subi %c1_i32, %6 : i32
    %c0_3 = arith.constant 0 : index
    %c0_4 = arith.constant 0 : index
    %8 = vector.load %arg5[%c0_3, %c0_4] : memref<2x16xf32, #tpu.memory_space<vmem>>, vector<2x16xf32>
    %c0_5 = arith.constant 0 : index
    %c0_6 = arith.constant 0 : index
    %9 = vector.load %arg6[%c0_5, %c0_6] : memref<2x16xf32, #tpu.memory_space<vmem>>, vector<2x16xf32>
    %c0_i32_7 = arith.constant 0 : i32
    %10 = arith.muli %7, %c0_i32_7 : i32
    %11 = arith.addi %5, %10 : i32
    %c0_8 = arith.constant 0 : index
    %12 = arith.index_cast %11 : i32 to index
    %c0_9 = arith.constant 0 : index
    %c0_10 = arith.constant 0 : index
    %13 = vector.load %arg2[%c0_8, %12, %c0_9, %c0_10] : memref<1x8x2x64xf32, #tpu.memory_space<vmem>>, vector<1x1x2x64xf32>
    %14 = vector.shape_cast %13 : vector<1x1x2x64xf32> to vector<2x64xf32>
    %cst = arith.constant dense<0.000000e+00> : vector<2x64xf32>
    %15 = tpu.matmul %8, %4, %cst {dimension_numbers = #tpu.dot_dimension_numbers<[1], [0], [0], [1], [0, 0, 1, 1], [], []>} : vector<2x16xf32>, vector<16x64xf32>, vector<2x64xf32> -> vector<2x64xf32>
    %16 = arith.addf %14, %15 : vector<2x64xf32>
    %17 = vector.extract_strided_slice %16 {offsets = [0, 0], sizes = [2, 16], strides = [1, 1]} : vector<2x64xf32> to vector<2x16xf32>
    %18 = arith.negf %17 : vector<2x16xf32>
    %19 = math.exp %18 : vector<2x16xf32>
    %cst_11 = arith.constant 1.000000e+00 : f32
    %20 = vector.broadcast %cst_11 : f32 to vector<2x16xf32>
    %21 = arith.addf %20, %19 : vector<2x16xf32>
    %22 = arith.divf %20, %21 : vector<2x16xf32>
    %23 = vector.extract_strided_slice %16 {offsets = [0, 16], sizes = [2, 16], strides = [1, 1]} : vector<2x64xf32> to vector<2x16xf32>
    %24 = arith.negf %23 : vector<2x16xf32>
    %25 = math.exp %24 : vector<2x16xf32>
    %cst_12 = arith.constant 1.000000e+00 : f32
    %26 = vector.broadcast %cst_12 : f32 to vector<2x16xf32>
    %27 = arith.addf %26, %25 : vector<2x16xf32>
    %28 = arith.divf %26, %27 : vector<2x16xf32>
    %29 = vector.extract_strided_slice %16 {offsets = [0, 32], sizes = [2, 16], strides = [1, 1]} : vector<2x64xf32> to vector<2x16xf32>
    %30 = math.tanh %29 : vector<2x16xf32>
    %31 = vector.extract_strided_slice %16 {offsets = [0, 48], sizes = [2, 16], strides = [1, 1]} : vector<2x64xf32> to vector<2x16xf32>
    %32 = arith.negf %31 : vector<2x16xf32>
    %33 = math.exp %32 : vector<2x16xf32>
    %cst_13 = arith.constant 1.000000e+00 : f32
    %34 = vector.broadcast %cst_13 : f32 to vector<2x16xf32>
    %35 = arith.addf %34, %33 : vector<2x16xf32>
    %36 = arith.divf %34, %35 : vector<2x16xf32>
    %37 = arith.mulf %28, %9 : vector<2x16xf32>
    %38 = arith.mulf %22, %30 : vector<2x16xf32>
    %39 = arith.addf %37, %38 : vector<2x16xf32>
    %40 = math.tanh %39 : vector<2x16xf32>
    %41 = arith.mulf %36, %40 : vector<2x16xf32>
    %c0_14 = arith.constant 0 : index
    %42 = arith.index_cast %11 : i32 to index
    %c0_15 = arith.constant 0 : index
    %c0_16 = arith.constant 0 : index
    %43 = vector.load %arg4[%c0_14, %42, %c0_15, %c0_16] : memref<1x8x2x16xf32, #tpu.memory_space<vmem>>, vector<1x1x2x16xf32>
    %44 = vector.shape_cast %43 : vector<1x1x2x16xf32> to vector<2x16xf32>
    %45 = vector.shape_cast %41 : vector<2x16xf32> to vector<1x1x2x16xf32>
    tpu.vector_store %arg4[%c0_14, %42, %c0_15, %c0_16], %45 {strides = array<i32>} : memref<1x8x2x16xf32, #tpu.memory_space<vmem>>, vector<1x1x2x16xf32>,
    %c1_i32_17 = arith.constant 1 : i32
    %46 = arith.muli %7, %c1_i32_17 : i32
    %47 = arith.addi %5, %46 : i32
    %c0_18 = arith.constant 0 : index
    %48 = arith.index_cast %47 : i32 to index
    %c0_19 = arith.constant 0 : index
    %c0_20 = arith.constant 0 : index
    %49 = vector.load %arg2[%c0_18, %48, %c0_19, %c0_20] : memref<1x8x2x64xf32, #tpu.memory_space<vmem>>, vector<1x1x2x64xf32>
    %50 = vector.shape_cast %49 : vector<1x1x2x64xf32> to vector<2x64xf32>
    %cst_21 = arith.constant dense<0.000000e+00> : vector<2x64xf32>
    %51 = tpu.matmul %41, %4, %cst_21 {dimension_numbers = #tpu.dot_dimension_numbers<[1], [0], [0], [1], [0, 0, 1, 1], [], []>} : vector<2x16xf32>, vector<16x64xf32>, vector<2x64xf32> -> vector<2x64xf32>
    %52 = arith.addf %50, %51 : vector<2x64xf32>
    %53 = vector.extract_strided_slice %52 {offsets = [0, 0], sizes = [2, 16], strides = [1, 1]} : vector<2x64xf32> to vector<2x16xf32>
    %54 = arith.negf %53 : vector<2x16xf32>
    %55 = math.exp %54 : vector<2x16xf32>
    %cst_22 = arith.constant 1.000000e+00 : f32
    %56 = vector.broadcast %cst_22 : f32 to vector<2x16xf32>
    %57 = arith.addf %56, %55 : vector<2x16xf32>
    %58 = arith.divf %56, %57 : vector<2x16xf32>
    %59 = vector.extract_strided_slice %52 {offsets = [0, 16], sizes = [2, 16], strides = [1, 1]} : vector<2x64xf32> to vector<2x16xf32>
    %60 = arith.negf %59 : vector<2x16xf32>
    %61 = math.exp %60 : vector<2x16xf32>
    %cst_23 = arith.constant 1.000000e+00 : f32
    %62 = vector.broadcast %cst_23 : f32 to vector<2x16xf32>
    %63 = arith.addf %62, %61 : vector<2x16xf32>
    %64 = arith.divf %62, %63 : vector<2x16xf32>
    %65 = vector.extract_strided_slice %52 {offsets = [0, 32], sizes = [2, 16], strides = [1, 1]} : vector<2x64xf32> to vector<2x16xf32>
    %66 = math.tanh %65 : vector<2x16xf32>
    %67 = vector.extract_strided_slice %52 {offsets = [0, 48], sizes = [2, 16], strides = [1, 1]} : vector<2x64xf32> to vector<2x16xf32>
    %68 = arith.negf %67 : vector<2x16xf32>
    %69 = math.exp %68 : vector<2x16xf32>
    %cst_24 = arith.constant 1.000000e+00 : f32
    %70 = vector.broadcast %cst_24 : f32 to vector<2x16xf32>
    %71 = arith.addf %70, %69 : vector<2x16xf32>
    %72 = arith.divf %70, %71 : vector<2x16xf32>
    %73 = arith.mulf %64, %39 : vector<2x16xf32>
    %74 = arith.mulf %58, %66 : vector<2x16xf32>
    %75 = arith.addf %73, %74 : vector<2x16xf32>
    %76 = math.tanh %75 : vector<2x16xf32>
    %77 = arith.mulf %72, %76 : vector<2x16xf32>
    %c0_25 = arith.constant 0 : index
    %78 = arith.index_cast %47 : i32 to index
    %c0_26 = arith.constant 0 : index
    %c0_27 = arith.constant 0 : index
    %79 = vector.load %arg4[%c0_25, %78, %c0_26, %c0_27] : memref<1x8x2x16xf32, #tpu.memory_space<vmem>>, vector<1x1x2x16xf32>
    %80 = vector.shape_cast %79 : vector<1x1x2x16xf32> to vector<2x16xf32>
    %81 = vector.shape_cast %77 : vector<2x16xf32> to vector<1x1x2x16xf32>
    tpu.vector_store %arg4[%c0_25, %78, %c0_26, %c0_27], %81 {strides = array<i32>} : memref<1x8x2x16xf32, #tpu.memory_space<vmem>>, vector<1x1x2x16xf32>,
    %c2_i32_28 = arith.constant 2 : i32
    %82 = arith.muli %7, %c2_i32_28 : i32
    %83 = arith.addi %5, %82 : i32
    %c0_29 = arith.constant 0 : index
    %84 = arith.index_cast %83 : i32 to index
    %c0_30 = arith.constant 0 : index
    %c0_31 = arith.constant 0 : index
    %85 = vector.load %arg2[%c0_29, %84, %c0_30, %c0_31] : memref<1x8x2x64xf32, #tpu.memory_space<vmem>>, vector<1x1x2x64xf32>
    %86 = vector.shape_cast %85 : vector<1x1x2x64xf32> to vector<2x64xf32>
    %cst_32 = arith.constant dense<0.000000e+00> : vector<2x64xf32>
    %87 = tpu.matmul %77, %4, %cst_32 {dimension_numbers = #tpu.dot_dimension_numbers<[1], [0], [0], [1], [0, 0, 1, 1], [], []>} : vector<2x16xf32>, vector<16x64xf32>, vector<2x64xf32> -> vector<2x64xf32>
    %88 = arith.addf %86, %87 : vector<2x64xf32>
    %89 = vector.extract_strided_slice %88 {offsets = [0, 0], sizes = [2, 16], strides = [1, 1]} : vector<2x64xf32> to vector<2x16xf32>
    %90 = arith.negf %89 : vector<2x16xf32>
    %91 = math.exp %90 : vector<2x16xf32>
    %cst_33 = arith.constant 1.000000e+00 : f32
    %92 = vector.broadcast %cst_33 : f32 to vector<2x16xf32>
    %93 = arith.addf %92, %91 : vector<2x16xf32>
    %94 = arith.divf %92, %93 : vector<2x16xf32>
    %95 = vector.extract_strided_slice %88 {offsets = [0, 16], sizes = [2, 16], strides = [1, 1]} : vector<2x64xf32> to vector<2x16xf32>
    %96 = arith.negf %95 : vector<2x16xf32>
    %97 = math.exp %96 : vector<2x16xf32>
    %cst_34 = arith.constant 1.000000e+00 : f32
    %98 = vector.broadcast %cst_34 : f32 to vector<2x16xf32>
    %99 = arith.addf %98, %97 : vector<2x16xf32>
    %100 = arith.divf %98, %99 : vector<2x16xf32>
    %101 = vector.extract_strided_slice %88 {offsets = [0, 32], sizes = [2, 16], strides = [1, 1]} : vector<2x64xf32> to vector<2x16xf32>
    %102 = math.tanh %101 : vector<2x16xf32>
    %103 = vector.extract_strided_slice %88 {offsets = [0, 48], sizes = [2, 16], strides = [1, 1]} : vector<2x64xf32> to vector<2x16xf32>
    %104 = arith.negf %103 : vector<2x16xf32>
    %105 = math.exp %104 : vector<2x16xf32>
    %cst_35 = arith.constant 1.000000e+00 : f32
    %106 = vector.broadcast %cst_35 : f32 to vector<2x16xf32>
    %107 = arith.addf %106, %105 : vector<2x16xf32>
    %108 = arith.divf %106, %107 : vector<2x16xf32>
    %109 = arith.mulf %100, %75 : vector<2x16xf32>
    %110 = arith.mulf %94, %102 : vector<2x16xf32>
    %111 = arith.addf %109, %110 : vector<2x16xf32>
    %112 = math.tanh %111 : vector<2x16xf32>
    %113 = arith.mulf %108, %112 : vector<2x16xf32>
    %c0_36 = arith.constant 0 : index
    %114 = arith.index_cast %83 : i32 to index
    %c0_37 = arith.constant 0 : index
    %c0_38 = arith.constant 0 : index
    %115 = vector.load %arg4[%c0_36, %114, %c0_37, %c0_38] : memref<1x8x2x16xf32, #tpu.memory_space<vmem>>, vector<1x1x2x16xf32>
    %116 = vector.shape_cast %115 : vector<1x1x2x16xf32> to vector<2x16xf32>
    %117 = vector.shape_cast %113 : vector<2x16xf32> to vector<1x1x2x16xf32>
    tpu.vector_store %arg4[%c0_36, %114, %c0_37, %c0_38], %117 {strides = array<i32>} : memref<1x8x2x16xf32, #tpu.memory_space<vmem>>, vector<1x1x2x16xf32>,
    %c3_i32 = arith.constant 3 : i32
    %118 = arith.muli %7, %c3_i32 : i32
    %119 = arith.addi %5, %118 : i32
    %c0_39 = arith.constant 0 : index
    %120 = arith.index_cast %119 : i32 to index
    %c0_40 = arith.constant 0 : index
    %c0_41 = arith.constant 0 : index
    %121 = vector.load %arg2[%c0_39, %120, %c0_40, %c0_41] : memref<1x8x2x64xf32, #tpu.memory_space<vmem>>, vector<1x1x2x64xf32>
    %122 = vector.shape_cast %121 : vector<1x1x2x64xf32> to vector<2x64xf32>
    %cst_42 = arith.constant dense<0.000000e+00> : vector<2x64xf32>
    %123 = tpu.matmul %113, %4, %cst_42 {dimension_numbers = #tpu.dot_dimension_numbers<[1], [0], [0], [1], [0, 0, 1, 1], [], []>} : vector<2x16xf32>, vector<16x64xf32>, vector<2x64xf32> -> vector<2x64xf32>
    %124 = arith.addf %122, %123 : vector<2x64xf32>
    %125 = vector.extract_strided_slice %124 {offsets = [0, 0], sizes = [2, 16], strides = [1, 1]} : vector<2x64xf32> to vector<2x16xf32>
    %126 = arith.negf %125 : vector<2x16xf32>
    %127 = math.exp %126 : vector<2x16xf32>
    %cst_43 = arith.constant 1.000000e+00 : f32
    %128 = vector.broadcast %cst_43 : f32 to vector<2x16xf32>
    %129 = arith.addf %128, %127 : vector<2x16xf32>
    %130 = arith.divf %128, %129 : vector<2x16xf32>
    %131 = vector.extract_strided_slice %124 {offsets = [0, 16], sizes = [2, 16], strides = [1, 1]} : vector<2x64xf32> to vector<2x16xf32>
    %132 = arith.negf %131 : vector<2x16xf32>
    %133 = math.exp %132 : vector<2x16xf32>
    %cst_44 = arith.constant 1.000000e+00 : f32
    %134 = vector.broadcast %cst_44 : f32 to vector<2x16xf32>
    %135 = arith.addf %134, %133 : vector<2x16xf32>
    %136 = arith.divf %134, %135 : vector<2x16xf32>
    %137 = vector.extract_strided_slice %124 {offsets = [0, 32], sizes = [2, 16], strides = [1, 1]} : vector<2x64xf32> to vector<2x16xf32>
    %138 = math.tanh %137 : vector<2x16xf32>
    %139 = vector.extract_strided_slice %124 {offsets = [0, 48], sizes = [2, 16], strides = [1, 1]} : vector<2x64xf32> to vector<2x16xf32>
    %140 = arith.negf %139 : vector<2x16xf32>
    %141 = math.exp %140 : vector<2x16xf32>
    %cst_45 = arith.constant 1.000000e+00 : f32
    %142 = vector.broadcast %cst_45 : f32 to vector<2x16xf32>
    %143 = arith.addf %142, %141 : vector<2x16xf32>
    %144 = arith.divf %142, %143 : vector<2x16xf32>
    %145 = arith.mulf %136, %111 : vector<2x16xf32>
    %146 = arith.mulf %130, %138 : vector<2x16xf32>
    %147 = arith.addf %145, %146 : vector<2x16xf32>
    %148 = math.tanh %147 : vector<2x16xf32>
    %149 = arith.mulf %144, %148 : vector<2x16xf32>
    %c0_46 = arith.constant 0 : index
    %150 = arith.index_cast %119 : i32 to index
    %c0_47 = arith.constant 0 : index
    %c0_48 = arith.constant 0 : index
    %151 = vector.load %arg4[%c0_46, %150, %c0_47, %c0_48] : memref<1x8x2x16xf32, #tpu.memory_space<vmem>>, vector<1x1x2x16xf32>
    %152 = vector.shape_cast %151 : vector<1x1x2x16xf32> to vector<2x16xf32>
    %153 = vector.shape_cast %149 : vector<2x16xf32> to vector<1x1x2x16xf32>
    tpu.vector_store %arg4[%c0_46, %150, %c0_47, %c0_48], %153 {strides = array<i32>} : memref<1x8x2x16xf32, #tpu.memory_space<vmem>>, vector<1x1x2x16xf32>,
    %c4_i32 = arith.constant 4 : i32
    %154 = arith.muli %7, %c4_i32 : i32
    %155 = arith.addi %5, %154 : i32
    %c0_49 = arith.constant 0 : index
    %156 = arith.index_cast %155 : i32 to index
    %c0_50 = arith.constant 0 : index
    %c0_51 = arith.constant 0 : index
    %157 = vector.load %arg2[%c0_49, %156, %c0_50, %c0_51] : memref<1x8x2x64xf32, #tpu.memory_space<vmem>>, vector<1x1x2x64xf32>
    %158 = vector.shape_cast %157 : vector<1x1x2x64xf32> to vector<2x64xf32>
    %cst_52 = arith.constant dense<0.000000e+00> : vector<2x64xf32>
    %159 = tpu.matmul %149, %4, %cst_52 {dimension_numbers = #tpu.dot_dimension_numbers<[1], [0], [0], [1], [0, 0, 1, 1], [], []>} : vector<2x16xf32>, vector<16x64xf32>, vector<2x64xf32> -> vector<2x64xf32>
    %160 = arith.addf %158, %159 : vector<2x64xf32>
    %161 = vector.extract_strided_slice %160 {offsets = [0, 0], sizes = [2, 16], strides = [1, 1]} : vector<2x64xf32> to vector<2x16xf32>
    %162 = arith.negf %161 : vector<2x16xf32>
    %163 = math.exp %162 : vector<2x16xf32>
    %cst_53 = arith.constant 1.000000e+00 : f32
    %164 = vector.broadcast %cst_53 : f32 to vector<2x16xf32>
    %165 = arith.addf %164, %163 : vector<2x16xf32>
    %166 = arith.divf %164, %165 : vector<2x16xf32>
    %167 = vector.extract_strided_slice %160 {offsets = [0, 16], sizes = [2, 16], strides = [1, 1]} : vector<2x64xf32> to vector<2x16xf32>
    %168 = arith.negf %167 : vector<2x16xf32>
    %169 = math.exp %168 : vector<2x16xf32>
    %cst_54 = arith.constant 1.000000e+00 : f32
    %170 = vector.broadcast %cst_54 : f32 to vector<2x16xf32>
    %171 = arith.addf %170, %169 : vector<2x16xf32>
    %172 = arith.divf %170, %171 : vector<2x16xf32>
    %173 = vector.extract_strided_slice %160 {offsets = [0, 32], sizes = [2, 16], strides = [1, 1]} : vector<2x64xf32> to vector<2x16xf32>
    %174 = math.tanh %173 : vector<2x16xf32>
    %175 = vector.extract_strided_slice %160 {offsets = [0, 48], sizes = [2, 16], strides = [1, 1]} : vector<2x64xf32> to vector<2x16xf32>
    %176 = arith.negf %175 : vector<2x16xf32>
    %177 = math.exp %176 : vector<2x16xf32>
    %cst_55 = arith.constant 1.000000e+00 : f32
    %178 = vector.broadcast %cst_55 : f32 to vector<2x16xf32>
    %179 = arith.addf %178, %177 : vector<2x16xf32>
    %180 = arith.divf %178, %179 : vector<2x16xf32>
    %181 = arith.mulf %172, %147 : vector<2x16xf32>
    %182 = arith.mulf %166, %174 : vector<2x16xf32>
    %183 = arith.addf %181, %182 : vector<2x16xf32>
    %184 = math.tanh %183 : vector<2x16xf32>
    %185 = arith.mulf %180, %184 : vector<2x16xf32>
    %c0_56 = arith.constant 0 : index
    %186 = arith.index_cast %155 : i32 to index
    %c0_57 = arith.constant 0 : index
    %c0_58 = arith.constant 0 : index
    %187 = vector.load %arg4[%c0_56, %186, %c0_57, %c0_58] : memref<1x8x2x16xf32, #tpu.memory_space<vmem>>, vector<1x1x2x16xf32>
    %188 = vector.shape_cast %187 : vector<1x1x2x16xf32> to vector<2x16xf32>
    %189 = vector.shape_cast %185 : vector<2x16xf32> to vector<1x1x2x16xf32>
    tpu.vector_store %arg4[%c0_56, %186, %c0_57, %c0_58], %189 {strides = array<i32>} : memref<1x8x2x16xf32, #tpu.memory_space<vmem>>, vector<1x1x2x16xf32>,
    %c5_i32 = arith.constant 5 : i32
    %190 = arith.muli %7, %c5_i32 : i32
    %191 = arith.addi %5, %190 : i32
    %c0_59 = arith.constant 0 : index
    %192 = arith.index_cast %191 : i32 to index
    %c0_60 = arith.constant 0 : index
    %c0_61 = arith.constant 0 : index
    %193 = vector.load %arg2[%c0_59, %192, %c0_60, %c0_61] : memref<1x8x2x64xf32, #tpu.memory_space<vmem>>, vector<1x1x2x64xf32>
    %194 = vector.shape_cast %193 : vector<1x1x2x64xf32> to vector<2x64xf32>
    %cst_62 = arith.constant dense<0.000000e+00> : vector<2x64xf32>
    %195 = tpu.matmul %185, %4, %cst_62 {dimension_numbers = #tpu.dot_dimension_numbers<[1], [0], [0], [1], [0, 0, 1, 1], [], []>} : vector<2x16xf32>, vector<16x64xf32>, vector<2x64xf32> -> vector<2x64xf32>
    %196 = arith.addf %194, %195 : vector<2x64xf32>
    %197 = vector.extract_strided_slice %196 {offsets = [0, 0], sizes = [2, 16], strides = [1, 1]} : vector<2x64xf32> to vector<2x16xf32>
    %198 = arith.negf %197 : vector<2x16xf32>
    %199 = math.exp %198 : vector<2x16xf32>
    %cst_63 = arith.constant 1.000000e+00 : f32
    %200 = vector.broadcast %cst_63 : f32 to vector<2x16xf32>
    %201 = arith.addf %200, %199 : vector<2x16xf32>
    %202 = arith.divf %200, %201 : vector<2x16xf32>
    %203 = vector.extract_strided_slice %196 {offsets = [0, 16], sizes = [2, 16], strides = [1, 1]} : vector<2x64xf32> to vector<2x16xf32>
    %204 = arith.negf %203 : vector<2x16xf32>
    %205 = math.exp %204 : vector<2x16xf32>
    %cst_64 = arith.constant 1.000000e+00 : f32
    %206 = vector.broadcast %cst_64 : f32 to vector<2x16xf32>
    %207 = arith.addf %206, %205 : vector<2x16xf32>
    %208 = arith.divf %206, %207 : vector<2x16xf32>
    %209 = vector.extract_strided_slice %196 {offsets = [0, 32], sizes = [2, 16], strides = [1, 1]} : vector<2x64xf32> to vector<2x16xf32>
    %210 = math.tanh %209 : vector<2x16xf32>
    %211 = vector.extract_strided_slice %196 {offsets = [0, 48], sizes = [2, 16], strides = [1, 1]} : vector<2x64xf32> to vector<2x16xf32>
    %212 = arith.negf %211 : vector<2x16xf32>
    %213 = math.exp %212 : vector<2x16xf32>
    %cst_65 = arith.constant 1.000000e+00 : f32
    %214 = vector.broadcast %cst_65 : f32 to vector<2x16xf32>
    %215 = arith.addf %214, %213 : vector<2x16xf32>
    %216 = arith.divf %214, %215 : vector<2x16xf32>
    %217 = arith.mulf %208, %183 : vector<2x16xf32>
    %218 = arith.mulf %202, %210 : vector<2x16xf32>
    %219 = arith.addf %217, %218 : vector<2x16xf32>
    %220 = math.tanh %219 : vector<2x16xf32>
    %221 = arith.mulf %216, %220 : vector<2x16xf32>
    %c0_66 = arith.constant 0 : index
    %222 = arith.index_cast %191 : i32 to index
    %c0_67 = arith.constant 0 : index
    %c0_68 = arith.constant 0 : index
    %223 = vector.load %arg4[%c0_66, %222, %c0_67, %c0_68] : memref<1x8x2x16xf32, #tpu.memory_space<vmem>>, vector<1x1x2x16xf32>
    %224 = vector.shape_cast %223 : vector<1x1x2x16xf32> to vector<2x16xf32>
    %225 = vector.shape_cast %221 : vector<2x16xf32> to vector<1x1x2x16xf32>
    tpu.vector_store %arg4[%c0_66, %222, %c0_67, %c0_68], %225 {strides = array<i32>} : memref<1x8x2x16xf32, #tpu.memory_space<vmem>>, vector<1x1x2x16xf32>,
    %c6_i32 = arith.constant 6 : i32
    %226 = arith.muli %7, %c6_i32 : i32
    %227 = arith.addi %5, %226 : i32
    %c0_69 = arith.constant 0 : index
    %228 = arith.index_cast %227 : i32 to index
    %c0_70 = arith.constant 0 : index
    %c0_71 = arith.constant 0 : index
    %229 = vector.load %arg2[%c0_69, %228, %c0_70, %c0_71] : memref<1x8x2x64xf32, #tpu.memory_space<vmem>>, vector<1x1x2x64xf32>
    %230 = vector.shape_cast %229 : vector<1x1x2x64xf32> to vector<2x64xf32>
    %cst_72 = arith.constant dense<0.000000e+00> : vector<2x64xf32>
    %231 = tpu.matmul %221, %4, %cst_72 {dimension_numbers = #tpu.dot_dimension_numbers<[1], [0], [0], [1], [0, 0, 1, 1], [], []>} : vector<2x16xf32>, vector<16x64xf32>, vector<2x64xf32> -> vector<2x64xf32>
    %232 = arith.addf %230, %231 : vector<2x64xf32>
    %233 = vector.extract_strided_slice %232 {offsets = [0, 0], sizes = [2, 16], strides = [1, 1]} : vector<2x64xf32> to vector<2x16xf32>
    %234 = arith.negf %233 : vector<2x16xf32>
    %235 = math.exp %234 : vector<2x16xf32>
    %cst_73 = arith.constant 1.000000e+00 : f32
    %236 = vector.broadcast %cst_73 : f32 to vector<2x16xf32>
    %237 = arith.addf %236, %235 : vector<2x16xf32>
    %238 = arith.divf %236, %237 : vector<2x16xf32>
    %239 = vector.extract_strided_slice %232 {offsets = [0, 16], sizes = [2, 16], strides = [1, 1]} : vector<2x64xf32> to vector<2x16xf32>
    %240 = arith.negf %239 : vector<2x16xf32>
    %241 = math.exp %240 : vector<2x16xf32>
    %cst_74 = arith.constant 1.000000e+00 : f32
    %242 = vector.broadcast %cst_74 : f32 to vector<2x16xf32>
    %243 = arith.addf %242, %241 : vector<2x16xf32>
    %244 = arith.divf %242, %243 : vector<2x16xf32>
    %245 = vector.extract_strided_slice %232 {offsets = [0, 32], sizes = [2, 16], strides = [1, 1]} : vector<2x64xf32> to vector<2x16xf32>
    %246 = math.tanh %245 : vector<2x16xf32>
    %247 = vector.extract_strided_slice %232 {offsets = [0, 48], sizes = [2, 16], strides = [1, 1]} : vector<2x64xf32> to vector<2x16xf32>
    %248 = arith.negf %247 : vector<2x16xf32>
    %249 = math.exp %248 : vector<2x16xf32>
    %cst_75 = arith.constant 1.000000e+00 : f32
    %250 = vector.broadcast %cst_75 : f32 to vector<2x16xf32>
    %251 = arith.addf %250, %249 : vector<2x16xf32>
    %252 = arith.divf %250, %251 : vector<2x16xf32>
    %253 = arith.mulf %244, %219 : vector<2x16xf32>
    %254 = arith.mulf %238, %246 : vector<2x16xf32>
    %255 = arith.addf %253, %254 : vector<2x16xf32>
    %256 = math.tanh %255 : vector<2x16xf32>
    %257 = arith.mulf %252, %256 : vector<2x16xf32>
    %c0_76 = arith.constant 0 : index
    %258 = arith.index_cast %227 : i32 to index
    %c0_77 = arith.constant 0 : index
    %c0_78 = arith.constant 0 : index
    %259 = vector.load %arg4[%c0_76, %258, %c0_77, %c0_78] : memref<1x8x2x16xf32, #tpu.memory_space<vmem>>, vector<1x1x2x16xf32>
    %260 = vector.shape_cast %259 : vector<1x1x2x16xf32> to vector<2x16xf32>
    %261 = vector.shape_cast %257 : vector<2x16xf32> to vector<1x1x2x16xf32>
    tpu.vector_store %arg4[%c0_76, %258, %c0_77, %c0_78], %261 {strides = array<i32>} : memref<1x8x2x16xf32, #tpu.memory_space<vmem>>, vector<1x1x2x16xf32>,
    %c7_i32_79 = arith.constant 7 : i32
    %262 = arith.muli %7, %c7_i32_79 : i32
    %263 = arith.addi %5, %262 : i32
    %c0_80 = arith.constant 0 : index
    %264 = arith.index_cast %263 : i32 to index
    %c0_81 = arith.constant 0 : index
    %c0_82 = arith.constant 0 : index
    %265 = vector.load %arg2[%c0_80, %264, %c0_81, %c0_82] : memref<1x8x2x64xf32, #tpu.memory_space<vmem>>, vector<1x1x2x64xf32>
    %266 = vector.shape_cast %265 : vector<1x1x2x64xf32> to vector<2x64xf32>
    %cst_83 = arith.constant dense<0.000000e+00> : vector<2x64xf32>
    %267 = tpu.matmul %257, %4, %cst_83 {dimension_numbers = #tpu.dot_dimension_numbers<[1], [0], [0], [1], [0, 0, 1, 1], [], []>} : vector<2x16xf32>, vector<16x64xf32>, vector<2x64xf32> -> vector<2x64xf32>
    %268 = arith.addf %266, %267 : vector<2x64xf32>
    %269 = vector.extract_strided_slice %268 {offsets = [0, 0], sizes = [2, 16], strides = [1, 1]} : vector<2x64xf32> to vector<2x16xf32>
    %270 = arith.negf %269 : vector<2x16xf32>
    %271 = math.exp %270 : vector<2x16xf32>
    %cst_84 = arith.constant 1.000000e+00 : f32
    %272 = vector.broadcast %cst_84 : f32 to vector<2x16xf32>
    %273 = arith.addf %272, %271 : vector<2x16xf32>
    %274 = arith.divf %272, %273 : vector<2x16xf32>
    %275 = vector.extract_strided_slice %268 {offsets = [0, 16], sizes = [2, 16], strides = [1, 1]} : vector<2x64xf32> to vector<2x16xf32>
    %276 = arith.negf %275 : vector<2x16xf32>
    %277 = math.exp %276 : vector<2x16xf32>
    %cst_85 = arith.constant 1.000000e+00 : f32
    %278 = vector.broadcast %cst_85 : f32 to vector<2x16xf32>
    %279 = arith.addf %278, %277 : vector<2x16xf32>
    %280 = arith.divf %278, %279 : vector<2x16xf32>
    %281 = vector.extract_strided_slice %268 {offsets = [0, 32], sizes = [2, 16], strides = [1, 1]} : vector<2x64xf32> to vector<2x16xf32>
    %282 = math.tanh %281 : vector<2x16xf32>
    %283 = vector.extract_strided_slice %268 {offsets = [0, 48], sizes = [2, 16], strides = [1, 1]} : vector<2x64xf32> to vector<2x16xf32>
    %284 = arith.negf %283 : vector<2x16xf32>
    %285 = math.exp %284 : vector<2x16xf32>
    %cst_86 = arith.constant 1.000000e+00 : f32
    %286 = vector.broadcast %cst_86 : f32 to vector<2x16xf32>
    %287 = arith.addf %286, %285 : vector<2x16xf32>
    %288 = arith.divf %286, %287 : vector<2x16xf32>
    %289 = arith.mulf %280, %255 : vector<2x16xf32>
    %290 = arith.mulf %274, %282 : vector<2x16xf32>
    %291 = arith.addf %289, %290 : vector<2x16xf32>
    %292 = math.tanh %291 : vector<2x16xf32>
    %293 = arith.mulf %288, %292 : vector<2x16xf32>
    %c0_87 = arith.constant 0 : index
    %294 = arith.index_cast %263 : i32 to index
    %c0_88 = arith.constant 0 : index
    %c0_89 = arith.constant 0 : index
    %295 = vector.load %arg4[%c0_87, %294, %c0_88, %c0_89] : memref<1x8x2x16xf32, #tpu.memory_space<vmem>>, vector<1x1x2x16xf32>
    %296 = vector.shape_cast %295 : vector<1x1x2x16xf32> to vector<2x16xf32>
    %297 = vector.shape_cast %293 : vector<2x16xf32> to vector<1x1x2x16xf32>
    tpu.vector_store %arg4[%c0_87, %294, %c0_88, %c0_89], %297 {strides = array<i32>} : memref<1x8x2x16xf32, #tpu.memory_space<vmem>>, vector<1x1x2x16xf32>,
    %c8_i32 = arith.constant 8 : i32
    %c0_90 = arith.constant 0 : index
    %c0_91 = arith.constant 0 : index
    %298 = vector.load %arg5[%c0_90, %c0_91] : memref<2x16xf32, #tpu.memory_space<vmem>>, vector<2x16xf32>
    tpu.vector_store %arg5[%c0_90, %c0_91], %293 {strides = array<i32>} : memref<2x16xf32, #tpu.memory_space<vmem>>, vector<2x16xf32>,
    %c0_92 = arith.constant 0 : index
    %c0_93 = arith.constant 0 : index
    %299 = vector.load %arg6[%c0_92, %c0_93] : memref<2x16xf32, #tpu.memory_space<vmem>>, vector<2x16xf32>
    tpu.vector_store %arg6[%c0_92, %c0_93], %291 {strides = array<i32>} : memref<2x16xf32, #tpu.memory_space<vmem>>, vector<2x16xf32>,
    return
  }
  func.func @transform_0(%arg0: i32, %arg1: i32) -> (i32, i32, i32, i32) {
    %c2_i32 = arith.constant 2 : i32
    %0 = arith.muli %c2_i32, %arg1 : i32
    %c0_i32 = arith.constant 0 : i32
    %1 = arith.subi %c0_i32, %0 : i32
    %2 = arith.muli %arg0, %1 : i32
    %3 = arith.addi %arg1, %2 : i32
    %c0_i32_0 = arith.constant 0 : i32
    %c0_i32_1 = arith.constant 0 : i32
    %c0_i32_2 = arith.constant 0 : i32
    return %arg0, %3, %c0_i32_0, %c0_i32_1 : i32, i32, i32, i32
  }
  func.func @transform_1(%arg0: i32, %arg1: i32) -> (i32, i32, i32) {
    %c0_i32 = arith.constant 0 : i32
    %c0_i32_0 = arith.constant 0 : i32
    %c0_i32_1 = arith.constant 0 : i32
    return %arg0, %c0_i32, %c0_i32_0 : i32, i32, i32
  }
  func.func @transform_2(%arg0: i32, %arg1: i32) -> (i32, i32, i32, i32) {
    %c2_i32 = arith.constant 2 : i32
    %0 = arith.muli %c2_i32, %arg1 : i32
    %c0_i32 = arith.constant 0 : i32
    %1 = arith.subi %c0_i32, %0 : i32
    %2 = arith.muli %arg0, %1 : i32
    %3 = arith.addi %arg1, %2 : i32
    %c0_i32_0 = arith.constant 0 : i32
    %c0_i32_1 = arith.constant 0 : i32
    %c0_i32_2 = arith.constant 0 : i32
    return %arg0, %3, %c0_i32_0, %c0_i32_1 : i32, i32, i32, i32
  }
}

</mosaic_0001>

<llo_original>
// kernel: base_model_forward.1
$region0: #{base_model_forward.1}
  #allocation0 [shape = 'u32[]', space=smem, size = 0x4, offset = 0x4, fixed_abs, tag = 'smem constant byte address 0x4 - core index']
  #allocation1 [shape = 'u32[144,128]{1,0:T(1,128)}', space=vmem, size = 0x12000, scoped, tag = 'internal scratch']
  #allocation2 [shape = 'f32[2,16]{1,0:T(2,128)}', space=vmem, size = 0x400, scoped, tag = 'scratch operand']
  #allocation3 [shape = 'f32[2,16]{1,0:T(2,128)}', space=vmem, size = 0x400, scoped, tag = 'scratch operand']
  %s0 = inlined_call_operand.vmem [shape: f32[2,8,2,64], index: 0, kind: input, shape index: {}]
  %s1 = inlined_call_operand.vmem [shape: f32[2,16,64], index: 1, kind: input, shape index: {}]
  %s2 = inlined_call_operand.vmem [shape: f32[2,8,2,16], index: 2, kind: output, shape index: {}]
  %s3 = sld [smem:[#allocation0]]
  $region45: #{base_model_forward.1} parent=0
    _
  %s5 = ssub.s32 1, %s3
  %s6 = scalar_select 0, %s5, %s3
  loop: start=0, step=1, limit=4
  $region2: #{base_model_forward.1} parent=0 // loop_pre_header
    _
  $region3: #{base_model_forward.1} parent=0 // loop_header
    %s8 = sphi 0, %s12
    %p9 = scmp.ge.s32.totalorder %s8, 4
    %s15 = sphi 0, %s27
    %s16 = sphi 0, %s23
    %s17 = sphi 0, %s15
    %s18 = sphi 0, %s16
    %s19 = sphi 0, %s17
    %s20 = sphi 0, %s18
    %s40 = sphi 0, %s42
    %s43 = sphi 0, %s40
    %s44 = sphi 0, %s43
    %s60 = sphi 0, %s44
    %s66 = sphi 0, %s68
    %s69 = sphi 0, %s66
    %s70 = sphi 0, %s69
    %s86 = sphi 0, %s70
    %s102 = sphi 0, %s104
    %s105 = sphi 0, %s102
    %s106 = sphi 0, %s105
    %s122 = sphi 0, %s106
  $region4: #{base_model_forward.1} parent=0 // loop_header_branch
    %11 = sbr.rel (%p9) target = $region8
  $region5: #{base_model_forward.1} parent=0 // loop_body
    %s13 = ssub.s32 %s8, 1
    %s14 = ssub.s32 %s8, 2
    %s21 = sadd.s32 1, %s16
    %p22 = scmp.ge.s32.totalorder %s21, 1
    %s23 = scalar_select %p22, 0, %s21
    %s24 = sadd.s32 1, %s15
    %s25 = scalar_select %p22, %s24, %s15
    %p26 = scmp.ge.s32.totalorder %s25, 2
    %s27 = scalar_select %p26, 0, %s25
    %s28 = smul.u32 %s16, 2
    %s29 = ssub.s32 0, %s28
    %s30 = smul.u32 %s15, %s29
    %s31 = sadd.s32 %s16, %s30
    %s32 = smul.u32 %s23, 2
    %s33 = ssub.s32 0, %s32
    %s34 = smul.u32 %s27, %s33
    %s35 = sadd.s32 %s23, %s34
    %s36 = ssub.s32 %s15, %s27
    %s37 = ssub.s32 %s31, %s35
    %s38 = sor.u32 %s36, %s37
    %p39 = scmp.eq.s32.totalorder %s38, 0
    %s41 = sadd.s32 %s40, 1
    %s42 = scalar_select %p39, %s40, %s41
    %p45 = pneg %p39
    %p46 = scmp.eq.s32.totalorder %s8, 1
    %p47 = por %p45, %p46
    %p48 = scmp.ne.s32.totalorder %s40, %s43
    %p49 = scmp.eq.s32.totalorder %s8, 0
    %p50 = por %p48, %p49
    %p51 = scmp.ne.s32.totalorder %s40, %s43
    %p52 = scmp.eq.s32.totalorder %s13, 1
    %p53 = por %p51, %p52
    %p54 = scmp.ne.s32.totalorder %s43, %s44
    %p55 = scmp.eq.s32.totalorder %s13, 0
    %p56 = por %p54, %p55
    %p57 = scmp.ne.s32.totalorder %s43, %s44
    %p58 = scmp.eq.s32.totalorder %s14, 1
    %p59 = por %p57, %p58
    %p61 = scmp.ne.s32.totalorder %s44, %s60
    %p62 = scmp.eq.s32.totalorder %s14, 0
    %p63 = por %p61, %p62
    %s64 = ssub.s32 %s15, %s27
    %p65 = scmp.eq.s32.totalorder %s64, 0
    %s67 = sadd.s32 %s66, 1
    %s68 = scalar_select %p65, %s66, %s67
    %p71 = pneg %p65
    %p72 = scmp.eq.s32.totalorder %s8, 1
    %p73 = por %p71, %p72
    %p74 = scmp.ne.s32.totalorder %s66, %s69
    %p75 = scmp.eq.s32.totalorder %s8, 0
    %p76 = por %p74, %p75
    %p77 = scmp.ne.s32.totalorder %s66, %s69
    %p78 = scmp.eq.s32.totalorder %s13, 1
    %p79 = por %p77, %p78
    %p80 = scmp.ne.s32.totalorder %s69, %s70
    %p81 = scmp.eq.s32.totalorder %s13, 0
    %p82 = por %p80, %p81
    %p83 = scmp.ne.s32.totalorder %s69, %s70
    %p84 = scmp.eq.s32.totalorder %s14, 1
    %p85 = por %p83, %p84
    %p87 = scmp.ne.s32.totalorder %s70, %s86
    %p88 = scmp.eq.s32.totalorder %s14, 0
    %p89 = por %p87, %p88
    %s90 = smul.u32 %s16, 2
    %s91 = ssub.s32 0, %s90
    %s92 = smul.u32 %s15, %s91
    %s93 = sadd.s32 %s16, %s92
    %s94 = smul.u32 %s23, 2
    %s95 = ssub.s32 0, %s94
    %s96 = smul.u32 %s27, %s95
    %s97 = sadd.s32 %s23, %s96
    %s98 = ssub.s32 %s15, %s27
    %s99 = ssub.s32 %s93, %s97
    %s100 = sor.u32 %s98, %s99
    %p101 = scmp.eq.s32.totalorder %s100, 0
    %s103 = sadd.s32 %s102, 1
    %s104 = scalar_select %p101, %s102, %s103
    %p107 = pneg %p101
    %p108 = scmp.eq.s32.totalorder %s8, 1
    %p109 = por %p107, %p108
    %p110 = scmp.ne.s32.totalorder %s102, %s105
    %p111 = scmp.eq.s32.totalorder %s8, 0
    %p112 = por %p110, %p111
    %p113 = scmp.ne.s32.totalorder %s102, %s105
    %p114 = scmp.eq.s32.totalorder %s13, 1
    %p115 = por %p113, %p114
    %p116 = scmp.ne.s32.totalorder %s105, %s106
    %p117 = scmp.eq.s32.totalorder %s13, 0
    %p118 = por %p116, %p117
    %p119 = scmp.ne.s32.totalorder %s105, %s106
    %p120 = scmp.eq.s32.totalorder %s14, 1
    %p121 = por %p119, %p120
    %p123 = scmp.ne.s32.totalorder %s106, %s122
    %p124 = scmp.eq.s32.totalorder %s14, 0
    %p125 = por %p123, %p124
    %p126 = scmp.le.s32.totalorder 1, %s8
    %p127 = scmp.lt.s32.totalorder %s8, 3
    %p128 = pnand %p126, %p127
    %p129 = pneg %p128
    // Predicated region
    $region9: #{base_model_forward.1} parent=5 // pred_check
      _
    $region10: #{base_model_forward.1} parent=5 // pred_check_branch
      %131 = sbr.rel (%p128) target = $region12
    $region11: #{base_model_forward.1} parent=5 // pred_region
      %s132 = ssub.s32 %s8, 1
    $region12: #{base_model_forward.1} parent=5 // pred_fallthru
      _
    %p133 = scmp.lt.s32.totalorder %s8, 2
    // Predicated region
    $region13: #{base_model_forward.1} parent=5 // pred_check
      %p134 = pneg %p133
    $region14: #{base_model_forward.1} parent=5 // pred_check_branch
      %136 = sbr.rel (%p134) target = $region16
    $region15: #{base_model_forward.1} parent=5 // pred_region
      // Predicated region
      $region17: #{base_model_forward.1} parent=15 // pred_check
        %p137 = pneg %p50
      $region18: #{base_model_forward.1} parent=15 // pred_check_branch
        %139 = sbr.rel (%p137) target = $region20
      $region19: #{base_model_forward.1} parent=15 // pred_region
        %s140 = smul.u32 %s16, 2
        %s141 = ssub.s32 0, %s140
        %s142 = smul.u32 %s15, %s141
        %s143 = sadd.s32 %s16, %s142
        %s144 = smul.u32 8, %s143
        %p145 = scmp.lt.s32.totalorder %s15, 1
        %s146 = scalar_select %p145, %s15, 1
        %p147 = scmp.lt.s32.totalorder %s144, 7
        %s148 = scalar_select %p147, %s144, 7
        %s149 = smul.addr %s146, 8
        %s150 = sadd.s32 %s148, %s149
        %s151 = smul.addr %s150, 2
        %s152 = scalar_lea.vmem %s0, %s151
        %s153 = smul.u32 %s16, 2
        %s154 = ssub.s32 0, %s153
        %s155 = smul.u32 %s15, %s154
        %s156 = sadd.s32 %s16, %s155
        %s157 = smul.u32 8, %s156
      $region20: #{base_model_forward.1} parent=15 // pred_fallthru
        _
      // Predicated region
      $region21: #{base_model_forward.1} parent=15 // pred_check
        %p158 = pneg %p76
      $region22: #{base_model_forward.1} parent=15 // pred_check_branch
        %160 = sbr.rel (%p158) target = $region24
      $region23: #{base_model_forward.1} parent=15 // pred_region
        %p161 = scmp.lt.s32.totalorder %s15, 1
        %s162 = scalar_select %p161, %s15, 1
        %s163 = smul.addr %s162, 2
        %s164 = smul.addr %s163, 8
        %s165 = scalar_lea.vmem %s1, %s164
      $region24: #{base_model_forward.1} parent=15 // pred_fallthru
        _
    $region16: #{base_model_forward.1} parent=5 // pred_fallthru
      _
    %p166 = scmp.le.s32.totalorder 1, %s8
    %p167 = scmp.lt.s32.totalorder %s8, 3
    %p168 = pnand %p166, %p167
    %p169 = pneg %p168
    // Predicated region
    $region25: #{base_model_forward.1} parent=5 // pred_check
      _
    $region26: #{base_model_forward.1} parent=5 // pred_check_branch
      %171 = sbr.rel (%p168) target = $region28
    $region27: #{base_model_forward.1} parent=5 // pred_region
      %s172 = ssub.s32 %s8, 1
      %s173 = smul.u32 %s18, 2
      %s174 = ssub.s32 0, %s173
      %s175 = smul.u32 %s17, %s174
      %s176 = sadd.s32 %s18, %s175
      %s177 = smul.u32 8, %s176
      %p178 = scmp.lt.s32.totalorder %s17, 1
      %s179 = scalar_select %p178, %s17, 1
      %p180 = scmp.lt.s32.totalorder %s177, 7
      %s181 = scalar_select %p180, %s177, 7
      %s182 = smul.addr %s179, 8
      %s183 = sadd.s32 %s181, %s182
      %s184 = smul.addr %s183, 2
      %s185 = scalar_lea.vmem %s0, %s184
      %p186 = pneg %p56
      %p187 = pneg %p53
      %p188 = scmp.lt.s32.totalorder %s17, 1
      %s189 = scalar_select %p188, %s17, 1
      %s190 = smul.addr %s189, 2
      %s191 = smul.addr %s190, 8
      %s192 = scalar_lea.vmem %s1, %s191
      %p193 = pneg %p82
      %p194 = pneg %p79
      %p195 = pneg %p118
      %p196 = pneg %p115
      %s197 = smul.u32 %s18, 2
      %s198 = ssub.s32 0, %s197
      %s199 = smul.u32 %s17, %s198
      %s200 = sadd.s32 %s18, %s199
      %s201 = smul.u32 8, %s200
      %p202 = scmp.lt.s32.totalorder %s17, 1
      %s203 = scalar_select %p202, %s17, 1
      %p204 = scmp.lt.s32.totalorder %s201, 7
      %s205 = scalar_select %p204, %s201, 7
      %s206 = smul.addr %s203, 8
      %s207 = sadd.s32 %s205, %s206
      %s208 = smul.addr %s207, 2
      %s209 = scalar_lea.vmem %s2, %s208
      %s210 = smul.u32 %s18, 2
      %s211 = ssub.s32 0, %s210
      %s212 = smul.u32 %s17, %s211
      %s213 = sadd.s32 %s18, %s212
      %s214 = smul.u32 8, %s213
      %p215 = scmp.lt.s32.totalorder %s17, 1
      %s216 = scalar_select %p215, %s17, 1
      %p217 = scmp.lt.s32.totalorder %s214, 7
      %s218 = scalar_select %p217, %s214, 7
      %s219 = smul.addr %s216, 8
      %s220 = sadd.s32 %s218, %s219
      %s221 = smul.addr %s220, 2
      %s222 = scalar_lea.vmem %s0, %s221
      %s223 = smul.u32 %s18, 2
      %s224 = ssub.s32 0, %s223
      %s225 = smul.u32 %s17, %s224
      %s226 = sadd.s32 %s18, %s225
      %s227 = smul.u32 8, %s226
      %p228 = scmp.lt.s32.totalorder %s17, 1
      %s229 = scalar_select %p228, %s17, 1
      %s230 = smul.addr %s229, 2
      %s231 = smul.addr %s230, 8
      %s232 = scalar_lea.vmem %s1, %s231
      %s233 = smul.u32 %s18, 2
      %s234 = ssub.s32 0, %s233
      %s235 = smul.u32 %s17, %s234
      %s236 = sadd.s32 %s18, %s235
      %s237 = smul.u32 8, %s236
      %p238 = scmp.lt.s32.totalorder %s17, 1
      %s239 = scalar_select %p238, %s17, 1
      %p240 = scmp.lt.s32.totalorder %s237, 7
      %s241 = scalar_select %p240, %s237, 7
      %s242 = smul.addr %s239, 8
      %s243 = sadd.s32 %s241, %s242
      %s244 = smul.addr %s243, 2
      %s245 = scalar_lea.vmem %s2, %s244
      %s246 = smul.u32 %s18, 2
      %s247 = ssub.s32 0, %s246
      %s248 = smul.u32 %s17, %s247
      %s249 = sadd.s32 %s18, %s248
      %s250 = smul.u32 8, %s249
      %p251 = scmp.eq.s32.totalorder %s18, 0
      // Predicated region
      $region29: #{base_model_forward.1} parent=27 // pred_check
        %p252 = pneg %p251
      $region30: #{base_model_forward.1} parent=27 // pred_check_branch
        %254 = sbr.rel (%p252) target = $region32
      $region31: #{base_model_forward.1} parent=27 // pred_region
        %vm255 = vcmask 123904
        %256 = vst.msk [vmem:[#allocation2] sm:$0x3] %vm255, 0.0
        %257 = vst.msk [vmem:[#allocation3] sm:$0x3] %vm255, 0.0
      $region32: #{base_model_forward.1} parent=27 // pred_fallthru
        _
      %v258 = vld [vmem:[%s232] sm:$0xff]
      %v259 = vld [vmem:[%s232 + $0x8] sm:$0xff]
      %s260 = smul.u32 %s17, 7
      %s261 = smul.u32 %s17, 2
      %s262 = ssub.s32 1, %s261
      %v263 = vld [vmem:[#allocation2] sm:$0x3]
      %v264 = vld [vmem:[#allocation3] sm:$0x3]
      %s265 = smul.u32 %s260, 2
      %s266 = scalar_lea.vmem %s222, %s265
      %v267 = vld [vmem:[%s266] sm:$0x3]
      %vm268 = vcmask 130048
      %v270 = vsel %vm268, %v263, 0
      %272 = vmatprep.subr.mxu0 0.0
      %273 = vmatpush1.msra.mxu0 0.0
      %274 = vmatprep.subr.mxu0 0.0
      %275 = vmatpush1.msra.mxu0 0.0
      %276 = vmatprep.subr.mxu0 0.0
      %277 = vmatpush1.msra.mxu0 0.0
      %278 = vmatprep.subr.mxu0 0.0
      %279 = vmatpush1.msra.mxu0 0.0
      %280 = vmatprep.subr.mxu0 0.0
      %281 = vmatpush1.msra.mxu0 0.0
      %282 = vmatprep.subr.mxu0 0.0
      %283 = vmatpush1.msra.mxu0 0.0
      %284 = vmatprep.subr.mxu0 0.0
      %285 = vmatpush1.msra.mxu0 0.0
      %286 = vmatprep.subr.mxu0 0.0
      %287 = vmatpush1.msra.mxu0 0.0
      %288 = vmatprep.subr.mxu0 0.0
      %289 = vmatpush1.msra.mxu0 0.0
      %290 = vmatprep.subr.mxu0 0.0
      %291 = vmatpush1.msra.mxu0 0.0
      %292 = vmatprep.subr.mxu0 0.0
      %293 = vmatpush1.msra.mxu0 0.0
      %294 = vmatprep.subr.mxu0 0.0
      %295 = vmatpush1.msra.mxu0 0.0
      %296 = vmatprep.subr.mxu0 0.0
      %297 = vmatpush1.msra.mxu0 0.0
      %298 = vmatprep.subr.mxu0 0.0
      %299 = vmatpush1.msra.mxu0 0.0
      %300 = vmatprep.subr.mxu0 0.0
      %301 = vmatpush1.msra.mxu0 %v259
      %302 = vmatprep.subr.mxu0 0.0
      %303 = vmatpush1.msra.mxu0 %v258
      %304 = vmatprep.subr.mxu0 0.0
      %305 = vmatpush2.msra.mxu0 0.0
      %306 = vmatprep.subr.mxu0 0.0
      %307 = vmatpush2.msra.mxu0 0.0
      %308 = vmatprep.subr.mxu0 0.0
      %309 = vmatpush2.msra.mxu0 0.0
      %310 = vmatprep.subr.mxu0 0.0
      %311 = vmatpush2.msra.mxu0 0.0
      %312 = vmatprep.subr.mxu0 0.0
      %313 = vmatpush2.msra.mxu0 0.0
      %314 = vmatprep.subr.mxu0 0.0
      %315 = vmatpush2.msra.mxu0 0.0
      %316 = vmatprep.subr.mxu0 0.0
      %317 = vmatpush2.msra.mxu0 0.0
      %318 = vmatprep.subr.mxu0 0.0
      %319 = vmatpush2.msra.mxu0 0.0
      %320 = vmatprep.subr.mxu0 0.0
      %321 = vmatpush2.msra.mxu0 0.0
      %322 = vmatprep.subr.mxu0 0.0
      %323 = vmatpush2.msra.mxu0 0.0
      %324 = vmatprep.subr.mxu0 0.0
      %325 = vmatpush2.msra.mxu0 0.0
      %326 = vmatprep.subr.mxu0 0.0
      %327 = vmatpush2.msra.mxu0 0.0
      %328 = vmatprep.subr.mxu0 0.0
      %329 = vmatpush2.msra.mxu0 0.0
      %330 = vmatprep.subr.mxu0 0.0
      %331 = vmatpush2.msra.mxu0 0.0
      %332 = vmatprep.subr.mxu0 0.0
      %333 = vmatpush2.msra.mxu0 0.0
      %334 = vmatprep.subr.mxu0 0.0
      %335 = vmatpush2.msra.mxu0 0.0
      %336 = vmatprep.mubr.f32.mxu0 0.0
      %337 = vmatmul.mubr.f32.gmra.mxu0 %v270
      %v338 = vpop.f32.mrf.mxu0
      %v339 = vadd.f32 0.0, %v338
      %v340 = vpop.f32.mrf.mxu0
      %341 = vdwg.mxu0
      %v342 = vadd.f32 %v267, %v339
      %v343 = vxor.u32 %v342, 2147483648
      %v344 = vmul.f32 %v343, 1.442695
      %v345 = vpow.pop %v344
      %v346 = vadd.f32 %v345, 1.0
      %v347 = vrcp.pop %v346
      %v348 = vmul.f32 1.0, %v347
      %v349 = vtanh.pop %v342
      %351 = vrot.lane.b32.xlu0 %v264, 16
      %v352 = vpop.permute.xlu0 %351
      %v354 = vmul.f32 %v348, %v352
      %356 = vrot.lane.b32.xlu0 %v349, 96
      %v357 = vpop.permute.xlu0 %356
      %v359 = vmul.f32 %v348, %v357
      %361 = vrot.lane.b32.xlu0 %v359, 16
      %v362 = vpop.permute.xlu0 %361
      %v364 = vadd.f32 %v354, %v362
      %v365 = vtanh.pop %v364
      %367 = vrot.lane.b32.xlu0 %v365, 32
      %v368 = vpop.permute.xlu0 %367
      %v370 = vmul.f32 %v348, %v368
      %372 = vrot.lane.b32.xlu0 %v370, 80
      %v373 = vpop.permute.xlu0 %372
      %s375 = scalar_lea.vmem %s245, %s265
      %vm376 = vcmask 123904
      %377 = vst.msk [vmem:[%s375] sm:$0x3] %vm376, %v373
      %s378 = sadd.s32 %s260, %s262
      %s379 = smul.u32 %s378, 2
      %s380 = scalar_lea.vmem %s222, %s379
      %v381 = vld [vmem:[%s380] sm:$0x3]
      %v382 = vsel %vm268, %v373, 0
      %384 = vmatprep.subr.mxu0 0.0
      %385 = vmatpush1.msra.mxu0 0.0
      %386 = vmatprep.subr.mxu0 0.0
      %387 = vmatpush1.msra.mxu0 0.0
      %388 = vmatprep.subr.mxu0 0.0
      %389 = vmatpush1.msra.mxu0 0.0
      %390 = vmatprep.subr.mxu0 0.0
      %391 = vmatpush1.msra.mxu0 0.0
      %392 = vmatprep.subr.mxu0 0.0
      %393 = vmatpush1.msra.mxu0 0.0
      %394 = vmatprep.subr.mxu0 0.0
      %395 = vmatpush1.msra.mxu0 0.0
      %396 = vmatprep.subr.mxu0 0.0
      %397 = vmatpush1.msra.mxu0 0.0
      %398 = vmatprep.subr.mxu0 0.0
      %399 = vmatpush1.msra.mxu0 0.0
      %400 = vmatprep.subr.mxu0 0.0
      %401 = vmatpush1.msra.mxu0 0.0
      %402 = vmatprep.subr.mxu0 0.0
      %403 = vmatpush1.msra.mxu0 0.0
      %404 = vmatprep.subr.mxu0 0.0
      %405 = vmatpush1.msra.mxu0 0.0
      %406 = vmatprep.subr.mxu0 0.0
      %407 = vmatpush1.msra.mxu0 0.0
      %408 = vmatprep.subr.mxu0 0.0
      %409 = vmatpush1.msra.mxu0 0.0
      %410 = vmatprep.subr.mxu0 0.0
      %411 = vmatpush1.msra.mxu0 0.0
      %412 = vmatprep.subr.mxu0 0.0
      %413 = vmatpush1.msra.mxu0 %v259
      %414 = vmatprep.subr.mxu0 0.0
      %415 = vmatpush1.msra.mxu0 %v258
      %416 = vmatprep.subr.mxu0 0.0
      %417 = vmatpush2.msra.mxu0 0.0
      %418 = vmatprep.subr.mxu0 0.0
      %419 = vmatpush2.msra.mxu0 0.0
      %420 = vmatprep.subr.mxu0 0.0
      %421 = vmatpush2.msra.mxu0 0.0
      %422 = vmatprep.subr.mxu0 0.0
      %423 = vmatpush2.msra.mxu0 0.0
      %424 = vmatprep.subr.mxu0 0.0
      %425 = vmatpush2.msra.mxu0 0.0
      %426 = vmatprep.subr.mxu0 0.0
      %427 = vmatpush2.msra.mxu0 0.0
      %428 = vmatprep.subr.mxu0 0.0
      %429 = vmatpush2.msra.mxu0 0.0
      %430 = vmatprep.subr.mxu0 0.0
      %431 = vmatpush2.msra.mxu0 0.0
      %432 = vmatprep.subr.mxu0 0.0
      %433 = vmatpush2.msra.mxu0 0.0
      %434 = vmatprep.subr.mxu0 0.0
      %435 = vmatpush2.msra.mxu0 0.0
      %436 = vmatprep.subr.mxu0 0.0
      %437 = vmatpush2.msra.mxu0 0.0
      %438 = vmatprep.subr.mxu0 0.0
      %439 = vmatpush2.msra.mxu0 0.0
      %440 = vmatprep.subr.mxu0 0.0
      %441 = vmatpush2.msra.mxu0 0.0
      %442 = vmatprep.subr.mxu0 0.0
      %443 = vmatpush2.msra.mxu0 0.0
      %444 = vmatprep.subr.mxu0 0.0
      %445 = vmatpush2.msra.mxu0 0.0
      %446 = vmatprep.subr.mxu0 0.0
      %447 = vmatpush2.msra.mxu0 0.0
      %448 = vmatprep.mubr.f32.mxu0 0.0
      %449 = vmatmul.mubr.f32.gmra.mxu0 %v382
      %v450 = vpop.f32.mrf.mxu0
      %v451 = vadd.f32 0.0, %v450
      %v452 = vpop.f32.mrf.mxu0
      %453 = vdwg.mxu0
      %v454 = vadd.f32 %v381, %v451
      %v455 = vxor.u32 %v454, 2147483648
      %v456 = vmul.f32 %v455, 1.442695
      %v457 = vpow.pop %v456
      %v458 = vadd.f32 %v457, 1.0
      %v459 = vrcp.pop %v458
      %v460 = vmul.f32 1.0, %v459
      %v461 = vtanh.pop %v454
      %v462 = vmul.f32 %v460, %v364
      %464 = vrot.lane.b32.xlu0 %v461, 96
      %v465 = vpop.permute.xlu0 %464
      %v467 = vmul.f32 %v460, %v465
      %469 = vrot.lane.b32.xlu0 %v467, 16
      %v470 = vpop.permute.xlu0 %469
      %v472 = vadd.f32 %v462, %v470
      %v473 = vtanh.pop %v472
      %475 = vrot.lane.b32.xlu0 %v473, 32
      %v476 = vpop.permute.xlu0 %475
      %v478 = vmul.f32 %v460, %v476
      %480 = vrot.lane.b32.xlu0 %v478, 80
      %v481 = vpop.permute.xlu0 %480
      %s483 = scalar_lea.vmem %s245, %s379
      %484 = vst.msk [vmem:[%s483] sm:$0x3] %vm376, %v481
      %s485 = smul.u32 %s262, 2
      %s486 = sadd.s32 %s260, %s485
      %s487 = smul.u32 %s486, 2
      %s488 = scalar_lea.vmem %s222, %s487
      %v489 = vld [vmem:[%s488] sm:$0x3]
      %v490 = vsel %vm268, %v481, 0
      %492 = vmatprep.subr.mxu0 0.0
      %493 = vmatpush1.msra.mxu0 0.0
      %494 = vmatprep.subr.mxu0 0.0
      %495 = vmatpush1.msra.mxu0 0.0
      %496 = vmatprep.subr.mxu0 0.0
      %497 = vmatpush1.msra.mxu0 0.0
      %498 = vmatprep.subr.mxu0 0.0
      %499 = vmatpush1.msra.mxu0 0.0
      %500 = vmatprep.subr.mxu0 0.0
      %501 = vmatpush1.msra.mxu0 0.0
      %502 = vmatprep.subr.mxu0 0.0
      %503 = vmatpush1.msra.mxu0 0.0
      %504 = vmatprep.subr.mxu0 0.0
      %505 = vmatpush1.msra.mxu0 0.0
      %506 = vmatprep.subr.mxu0 0.0
      %507 = vmatpush1.msra.mxu0 0.0
      %508 = vmatprep.subr.mxu0 0.0
      %509 = vmatpush1.msra.mxu0 0.0
      %510 = vmatprep.subr.mxu0 0.0
      %511 = vmatpush1.msra.mxu0 0.0
      %512 = vmatprep.subr.mxu0 0.0
      %513 = vmatpush1.msra.mxu0 0.0
      %514 = vmatprep.subr.mxu0 0.0
      %515 = vmatpush1.msra.mxu0 0.0
      %516 = vmatprep.subr.mxu0 0.0
      %517 = vmatpush1.msra.mxu0 0.0
      %518 = vmatprep.subr.mxu0 0.0
      %519 = vmatpush1.msra.mxu0 0.0
      %520 = vmatprep.subr.mxu0 0.0
      %521 = vmatpush1.msra.mxu0 %v259
      %522 = vmatprep.subr.mxu0 0.0
      %523 = vmatpush1.msra.mxu0 %v258
      %524 = vmatprep.subr.mxu0 0.0
      %525 = vmatpush2.msra.mxu0 0.0
      %526 = vmatprep.subr.mxu0 0.0
      %527 = vmatpush2.msra.mxu0 0.0
      %528 = vmatprep.subr.mxu0 0.0
      %529 = vmatpush2.msra.mxu0 0.0
      %530 = vmatprep.subr.mxu0 0.0
      %531 = vmatpush2.msra.mxu0 0.0
      %532 = vmatprep.subr.mxu0 0.0
      %533 = vmatpush2.msra.mxu0 0.0
      %534 = vmatprep.subr.mxu0 0.0
      %535 = vmatpush2.msra.mxu0 0.0
      %536 = vmatprep.subr.mxu0 0.0
      %537 = vmatpush2.msra.mxu0 0.0
      %538 = vmatprep.subr.mxu0 0.0
      %539 = vmatpush2.msra.mxu0 0.0
      %540 = vmatprep.subr.mxu0 0.0
      %541 = vmatpush2.msra.mxu0 0.0
      %542 = vmatprep.subr.mxu0 0.0
      %543 = vmatpush2.msra.mxu0 0.0
      %544 = vmatprep.subr.mxu0 0.0
      %545 = vmatpush2.msra.mxu0 0.0
      %546 = vmatprep.subr.mxu0 0.0
      %547 = vmatpush2.msra.mxu0 0.0
      %548 = vmatprep.subr.mxu0 0.0
      %549 = vmatpush2.msra.mxu0 0.0
      %550 = vmatprep.subr.mxu0 0.0
      %551 = vmatpush2.msra.mxu0 0.0
      %552 = vmatprep.subr.mxu0 0.0
      %553 = vmatpush2.msra.mxu0 0.0
      %554 = vmatprep.subr.mxu0 0.0
      %555 = vmatpush2.msra.mxu0 0.0
      %556 = vmatprep.mubr.f32.mxu0 0.0
      %557 = vmatmul.mubr.f32.gmra.mxu0 %v490
      %v558 = vpop.f32.mrf.mxu0
      %v559 = vadd.f32 0.0, %v558
      %v560 = vpop.f32.mrf.mxu0
      %561 = vdwg.mxu0
      %v562 = vadd.f32 %v489, %v559
      %v563 = vxor.u32 %v562, 2147483648
      %v564 = vmul.f32 %v563, 1.442695
      %v565 = vpow.pop %v564
      %v566 = vadd.f32 %v565, 1.0
      %v567 = vrcp.pop %v566
      %v568 = vmul.f32 1.0, %v567
      %v569 = vtanh.pop %v562
      %v570 = vmul.f32 %v568, %v472
      %572 = vrot.lane.b32.xlu0 %v569, 96
      %v573 = vpop.permute.xlu0 %572
      %v575 = vmul.f32 %v568, %v573
      %577 = vrot.lane.b32.xlu0 %v575, 16
      %v578 = vpop.permute.xlu0 %577
      %v580 = vadd.f32 %v570, %v578
      %v581 = vtanh.pop %v580
      %583 = vrot.lane.b32.xlu0 %v581, 32
      %v584 = vpop.permute.xlu0 %583
      %v586 = vmul.f32 %v568, %v584
      %588 = vrot.lane.b32.xlu0 %v586, 80
      %v589 = vpop.permute.xlu0 %588
      %s591 = scalar_lea.vmem %s245, %s487
      %592 = vst.msk [vmem:[%s591] sm:$0x3] %vm376, %v589
      %s593 = smul.u32 %s262, 3
      %s594 = sadd.s32 %s260, %s593
      %s595 = smul.u32 %s594, 2
      %s596 = scalar_lea.vmem %s222, %s595
      %v597 = vld [vmem:[%s596] sm:$0x3]
      %v598 = vsel %vm268, %v589, 0
      %600 = vmatprep.subr.mxu0 0.0
      %601 = vmatpush1.msra.mxu0 0.0
      %602 = vmatprep.subr.mxu0 0.0
      %603 = vmatpush1.msra.mxu0 0.0
      %604 = vmatprep.subr.mxu0 0.0
      %605 = vmatpush1.msra.mxu0 0.0
      %606 = vmatprep.subr.mxu0 0.0
      %607 = vmatpush1.msra.mxu0 0.0
      %608 = vmatprep.subr.mxu0 0.0
      %609 = vmatpush1.msra.mxu0 0.0
      %610 = vmatprep.subr.mxu0 0.0
      %611 = vmatpush1.msra.mxu0 0.0
      %612 = vmatprep.subr.mxu0 0.0
      %613 = vmatpush1.msra.mxu0 0.0
      %614 = vmatprep.subr.mxu0 0.0
      %615 = vmatpush1.msra.mxu0 0.0
      %616 = vmatprep.subr.mxu0 0.0
      %617 = vmatpush1.msra.mxu0 0.0
      %618 = vmatprep.subr.mxu0 0.0
      %619 = vmatpush1.msra.mxu0 0.0
      %620 = vmatprep.subr.mxu0 0.0
      %621 = vmatpush1.msra.mxu0 0.0
      %622 = vmatprep.subr.mxu0 0.0
      %623 = vmatpush1.msra.mxu0 0.0
      %624 = vmatprep.subr.mxu0 0.0
      %625 = vmatpush1.msra.mxu0 0.0
      %626 = vmatprep.subr.mxu0 0.0
      %627 = vmatpush1.msra.mxu0 0.0
      %628 = vmatprep.subr.mxu0 0.0
      %629 = vmatpush1.msra.mxu0 %v259
      %630 = vmatprep.subr.mxu0 0.0
      %631 = vmatpush1.msra.mxu0 %v258
      %632 = vmatprep.subr.mxu0 0.0
      %633 = vmatpush2.msra.mxu0 0.0
      %634 = vmatprep.subr.mxu0 0.0
      %635 = vmatpush2.msra.mxu0 0.0
      %636 = vmatprep.subr.mxu0 0.0
      %637 = vmatpush2.msra.mxu0 0.0
      %638 = vmatprep.subr.mxu0 0.0
      %639 = vmatpush2.msra.mxu0 0.0
      %640 = vmatprep.subr.mxu0 0.0
      %641 = vmatpush2.msra.mxu0 0.0
      %642 = vmatprep.subr.mxu0 0.0
      %643 = vmatpush2.msra.mxu0 0.0
      %644 = vmatprep.subr.mxu0 0.0
      %645 = vmatpush2.msra.mxu0 0.0
      %646 = vmatprep.subr.mxu0 0.0
      %647 = vmatpush2.msra.mxu0 0.0
      %648 = vmatprep.subr.mxu0 0.0
      %649 = vmatpush2.msra.mxu0 0.0
      %650 = vmatprep.subr.mxu0 0.0
      %651 = vmatpush2.msra.mxu0 0.0
      %652 = vmatprep.subr.mxu0 0.0
      %653 = vmatpush2.msra.mxu0 0.0
      %654 = vmatprep.subr.mxu0 0.0
      %655 = vmatpush2.msra.mxu0 0.0
      %656 = vmatprep.subr.mxu0 0.0
      %657 = vmatpush2.msra.mxu0 0.0
      %658 = vmatprep.subr.mxu0 0.0
      %659 = vmatpush2.msra.mxu0 0.0
      %660 = vmatprep.subr.mxu0 0.0
      %661 = vmatpush2.msra.mxu0 0.0
      %662 = vmatprep.subr.mxu0 0.0
      %663 = vmatpush2.msra.mxu0 0.0
      %664 = vmatprep.mubr.f32.mxu0 0.0
      %665 = vmatmul.mubr.f32.gmra.mxu0 %v598
      %v666 = vpop.f32.mrf.mxu0
      %v667 = vadd.f32 0.0, %v666
      %v668 = vpop.f32.mrf.mxu0
      %669 = vdwg.mxu0
      %v670 = vadd.f32 %v597, %v667
      %v671 = vxor.u32 %v670, 2147483648
      %v672 = vmul.f32 %v671, 1.442695
      %v673 = vpow.pop %v672
      %v674 = vadd.f32 %v673, 1.0
      %v675 = vrcp.pop %v674
      %v676 = vmul.f32 1.0, %v675
      %v677 = vtanh.pop %v670
      %v678 = vmul.f32 %v676, %v580
      %680 = vrot.lane.b32.xlu0 %v677, 96
      %v681 = vpop.permute.xlu0 %680
      %v683 = vmul.f32 %v676, %v681
      %685 = vrot.lane.b32.xlu0 %v683, 16
      %v686 = vpop.permute.xlu0 %685
      %v688 = vadd.f32 %v678, %v686
      %v689 = vtanh.pop %v688
      %691 = vrot.lane.b32.xlu0 %v689, 32
      %v692 = vpop.permute.xlu0 %691
      %v694 = vmul.f32 %v676, %v692
      %696 = vrot.lane.b32.xlu0 %v694, 80
      %v697 = vpop.permute.xlu0 %696
      %s699 = scalar_lea.vmem %s245, %s595
      %700 = vst.msk [vmem:[%s699] sm:$0x3] %vm376, %v697
      %s701 = smul.u32 %s262, 4
      %s702 = sadd.s32 %s260, %s701
      %s703 = smul.u32 %s702, 2
      %s704 = scalar_lea.vmem %s222, %s703
      %v705 = vld [vmem:[%s704] sm:$0x3]
      %v706 = vsel %vm268, %v697, 0
      %708 = vmatprep.subr.mxu0 0.0
      %709 = vmatpush1.msra.mxu0 0.0
      %710 = vmatprep.subr.mxu0 0.0
      %711 = vmatpush1.msra.mxu0 0.0
      %712 = vmatprep.subr.mxu0 0.0
      %713 = vmatpush1.msra.mxu0 0.0
      %714 = vmatprep.subr.mxu0 0.0
      %715 = vmatpush1.msra.mxu0 0.0
      %716 = vmatprep.subr.mxu0 0.0
      %717 = vmatpush1.msra.mxu0 0.0
      %718 = vmatprep.subr.mxu0 0.0
      %719 = vmatpush1.msra.mxu0 0.0
      %720 = vmatprep.subr.mxu0 0.0
      %721 = vmatpush1.msra.mxu0 0.0
      %722 = vmatprep.subr.mxu0 0.0
      %723 = vmatpush1.msra.mxu0 0.0
      %724 = vmatprep.subr.mxu0 0.0
      %725 = vmatpush1.msra.mxu0 0.0
      %726 = vmatprep.subr.mxu0 0.0
      %727 = vmatpush1.msra.mxu0 0.0
      %728 = vmatprep.subr.mxu0 0.0
      %729 = vmatpush1.msra.mxu0 0.0
      %730 = vmatprep.subr.mxu0 0.0
      %731 = vmatpush1.msra.mxu0 0.0
      %732 = vmatprep.subr.mxu0 0.0
      %733 = vmatpush1.msra.mxu0 0.0
      %734 = vmatprep.subr.mxu0 0.0
      %735 = vmatpush1.msra.mxu0 0.0
      %736 = vmatprep.subr.mxu0 0.0
      %737 = vmatpush1.msra.mxu0 %v259
      %738 = vmatprep.subr.mxu0 0.0
      %739 = vmatpush1.msra.mxu0 %v258
      %740 = vmatprep.subr.mxu0 0.0
      %741 = vmatpush2.msra.mxu0 0.0
      %742 = vmatprep.subr.mxu0 0.0
      %743 = vmatpush2.msra.mxu0 0.0
      %744 = vmatprep.subr.mxu0 0.0
      %745 = vmatpush2.msra.mxu0 0.0
      %746 = vmatprep.subr.mxu0 0.0
      %747 = vmatpush2.msra.mxu0 0.0
      %748 = vmatprep.subr.mxu0 0.0
      %749 = vmatpush2.msra.mxu0 0.0
      %750 = vmatprep.subr.mxu0 0.0
      %751 = vmatpush2.msra.mxu0 0.0
      %752 = vmatprep.subr.mxu0 0.0
      %753 = vmatpush2.msra.mxu0 0.0
      %754 = vmatprep.subr.mxu0 0.0
      %755 = vmatpush2.msra.mxu0 0.0
      %756 = vmatprep.subr.mxu0 0.0
      %757 = vmatpush2.msra.mxu0 0.0
      %758 = vmatprep.subr.mxu0 0.0
      %759 = vmatpush2.msra.mxu0 0.0
      %760 = vmatprep.subr.mxu0 0.0
      %761 = vmatpush2.msra.mxu0 0.0
      %762 = vmatprep.subr.mxu0 0.0
      %763 = vmatpush2.msra.mxu0 0.0
      %764 = vmatprep.subr.mxu0 0.0
      %765 = vmatpush2.msra.mxu0 0.0
      %766 = vmatprep.subr.mxu0 0.0
      %767 = vmatpush2.msra.mxu0 0.0
      %768 = vmatprep.subr.mxu0 0.0
      %769 = vmatpush2.msra.mxu0 0.0
      %770 = vmatprep.subr.mxu0 0.0
      %771 = vmatpush2.msra.mxu0 0.0
      %772 = vmatprep.mubr.f32.mxu0 0.0
      %773 = vmatmul.mubr.f32.gmra.mxu0 %v706
      %v774 = vpop.f32.mrf.mxu0
      %v775 = vadd.f32 0.0, %v774
      %v776 = vpop.f32.mrf.mxu0
      %777 = vdwg.mxu0
      %v778 = vadd.f32 %v705, %v775
      %v779 = vxor.u32 %v778, 2147483648
      %v780 = vmul.f32 %v779, 1.442695
      %v781 = vpow.pop %v780
      %v782 = vadd.f32 %v781, 1.0
      %v783 = vrcp.pop %v782
      %v784 = vmul.f32 1.0, %v783
      %v785 = vtanh.pop %v778
      %v786 = vmul.f32 %v784, %v688
      %788 = vrot.lane.b32.xlu0 %v785, 96
      %v789 = vpop.permute.xlu0 %788
      %v791 = vmul.f32 %v784, %v789
      %793 = vrot.lane.b32.xlu0 %v791, 16
      %v794 = vpop.permute.xlu0 %793
      %v796 = vadd.f32 %v786, %v794
      %v797 = vtanh.pop %v796
      %799 = vrot.lane.b32.xlu0 %v797, 32
      %v800 = vpop.permute.xlu0 %799
      %v802 = vmul.f32 %v784, %v800
      %804 = vrot.lane.b32.xlu0 %v802, 80
      %v805 = vpop.permute.xlu0 %804
      %s807 = scalar_lea.vmem %s245, %s703
      %808 = vst.msk [vmem:[%s807] sm:$0x3] %vm376, %v805
      %s809 = smul.u32 %s262, 5
      %s810 = sadd.s32 %s260, %s809
      %s811 = smul.u32 %s810, 2
      %s812 = scalar_lea.vmem %s222, %s811
      %v813 = vld [vmem:[%s812] sm:$0x3]
      %v814 = vsel %vm268, %v805, 0
      %816 = vmatprep.subr.mxu0 0.0
      %817 = vmatpush1.msra.mxu0 0.0
      %818 = vmatprep.subr.mxu0 0.0
      %819 = vmatpush1.msra.mxu0 0.0
      %820 = vmatprep.subr.mxu0 0.0
      %821 = vmatpush1.msra.mxu0 0.0
      %822 = vmatprep.subr.mxu0 0.0
      %823 = vmatpush1.msra.mxu0 0.0
      %824 = vmatprep.subr.mxu0 0.0
      %825 = vmatpush1.msra.mxu0 0.0
      %826 = vmatprep.subr.mxu0 0.0
      %827 = vmatpush1.msra.mxu0 0.0
      %828 = vmatprep.subr.mxu0 0.0
      %829 = vmatpush1.msra.mxu0 0.0
      %830 = vmatprep.subr.mxu0 0.0
      %831 = vmatpush1.msra.mxu0 0.0
      %832 = vmatprep.subr.mxu0 0.0
      %833 = vmatpush1.msra.mxu0 0.0
      %834 = vmatprep.subr.mxu0 0.0
      %835 = vmatpush1.msra.mxu0 0.0
      %836 = vmatprep.subr.mxu0 0.0
      %837 = vmatpush1.msra.mxu0 0.0
      %838 = vmatprep.subr.mxu0 0.0
      %839 = vmatpush1.msra.mxu0 0.0
      %840 = vmatprep.subr.mxu0 0.0
      %841 = vmatpush1.msra.mxu0 0.0
      %842 = vmatprep.subr.mxu0 0.0
      %843 = vmatpush1.msra.mxu0 0.0
      %844 = vmatprep.subr.mxu0 0.0
      %845 = vmatpush1.msra.mxu0 %v259
      %846 = vmatprep.subr.mxu0 0.0
      %847 = vmatpush1.msra.mxu0 %v258
      %848 = vmatprep.subr.mxu0 0.0
      %849 = vmatpush2.msra.mxu0 0.0
      %850 = vmatprep.subr.mxu0 0.0
      %851 = vmatpush2.msra.mxu0 0.0
      %852 = vmatprep.subr.mxu0 0.0
      %853 = vmatpush2.msra.mxu0 0.0
      %854 = vmatprep.subr.mxu0 0.0
      %855 = vmatpush2.msra.mxu0 0.0
      %856 = vmatprep.subr.mxu0 0.0
      %857 = vmatpush2.msra.mxu0 0.0
      %858 = vmatprep.subr.mxu0 0.0
      %859 = vmatpush2.msra.mxu0 0.0
      %860 = vmatprep.subr.mxu0 0.0
      %861 = vmatpush2.msra.mxu0 0.0
      %862 = vmatprep.subr.mxu0 0.0
      %863 = vmatpush2.msra.mxu0 0.0
      %864 = vmatprep.subr.mxu0 0.0
      %865 = vmatpush2.msra.mxu0 0.0
      %866 = vmatprep.subr.mxu0 0.0
      %867 = vmatpush2.msra.mxu0 0.0
      %868 = vmatprep.subr.mxu0 0.0
      %869 = vmatpush2.msra.mxu0 0.0
      %870 = vmatprep.subr.mxu0 0.0
      %871 = vmatpush2.msra.mxu0 0.0
      %872 = vmatprep.subr.mxu0 0.0
      %873 = vmatpush2.msra.mxu0 0.0
      %874 = vmatprep.subr.mxu0 0.0
      %875 = vmatpush2.msra.mxu0 0.0
      %876 = vmatprep.subr.mxu0 0.0
      %877 = vmatpush2.msra.mxu0 0.0
      %878 = vmatprep.subr.mxu0 0.0
      %879 = vmatpush2.msra.mxu0 0.0
      %880 = vmatprep.mubr.f32.mxu0 0.0
      %881 = vmatmul.mubr.f32.gmra.mxu0 %v814
      %v882 = vpop.f32.mrf.mxu0
      %v883 = vadd.f32 0.0, %v882
      %v884 = vpop.f32.mrf.mxu0
      %885 = vdwg.mxu0
      %v886 = vadd.f32 %v813, %v883
      %v887 = vxor.u32 %v886, 2147483648
      %v888 = vmul.f32 %v887, 1.442695
      %v889 = vpow.pop %v888
      %v890 = vadd.f32 %v889, 1.0
      %v891 = vrcp.pop %v890
      %v892 = vmul.f32 1.0, %v891
      %v893 = vtanh.pop %v886
      %v894 = vmul.f32 %v892, %v796
      %896 = vrot.lane.b32.xlu0 %v893, 96
      %v897 = vpop.permute.xlu0 %896
      %v899 = vmul.f32 %v892, %v897
      %901 = vrot.lane.b32.xlu0 %v899, 16
      %v902 = vpop.permute.xlu0 %901
      %v904 = vadd.f32 %v894, %v902
      %v905 = vtanh.pop %v904
      %907 = vrot.lane.b32.xlu0 %v905, 32
      %v908 = vpop.permute.xlu0 %907
      %v910 = vmul.f32 %v892, %v908
      %912 = vrot.lane.b32.xlu0 %v910, 80
      %v913 = vpop.permute.xlu0 %912
      %s915 = scalar_lea.vmem %s245, %s811
      %916 = vst.msk [vmem:[%s915] sm:$0x3] %vm376, %v913
      %s917 = smul.u32 %s262, 6
      %s918 = sadd.s32 %s260, %s917
      %s919 = smul.u32 %s918, 2
      %s920 = scalar_lea.vmem %s222, %s919
      %v921 = vld [vmem:[%s920] sm:$0x3]
      %v922 = vsel %vm268, %v913, 0
      %924 = vmatprep.subr.mxu0 0.0
      %925 = vmatpush1.msra.mxu0 0.0
      %926 = vmatprep.subr.mxu0 0.0
      %927 = vmatpush1.msra.mxu0 0.0
      %928 = vmatprep.subr.mxu0 0.0
      %929 = vmatpush1.msra.mxu0 0.0
      %930 = vmatprep.subr.mxu0 0.0
      %931 = vmatpush1.msra.mxu0 0.0
      %932 = vmatprep.subr.mxu0 0.0
      %933 = vmatpush1.msra.mxu0 0.0
      %934 = vmatprep.subr.mxu0 0.0
      %935 = vmatpush1.msra.mxu0 0.0
      %936 = vmatprep.subr.mxu0 0.0
      %937 = vmatpush1.msra.mxu0 0.0
      %938 = vmatprep.subr.mxu0 0.0
      %939 = vmatpush1.msra.mxu0 0.0
      %940 = vmatprep.subr.mxu0 0.0
      %941 = vmatpush1.msra.mxu0 0.0
      %942 = vmatprep.subr.mxu0 0.0
      %943 = vmatpush1.msra.mxu0 0.0
      %944 = vmatprep.subr.mxu0 0.0
      %945 = vmatpush1.msra.mxu0 0.0
      %946 = vmatprep.subr.mxu0 0.0
      %947 = vmatpush1.msra.mxu0 0.0
      %948 = vmatprep.subr.mxu0 0.0
      %949 = vmatpush1.msra.mxu0 0.0
      %950 = vmatprep.subr.mxu0 0.0
      %951 = vmatpush1.msra.mxu0 0.0
      %952 = vmatprep.subr.mxu0 0.0
      %953 = vmatpush1.msra.mxu0 %v259
      %954 = vmatprep.subr.mxu0 0.0
      %955 = vmatpush1.msra.mxu0 %v258
      %956 = vmatprep.subr.mxu0 0.0
      %957 = vmatpush2.msra.mxu0 0.0
      %958 = vmatprep.subr.mxu0 0.0
      %959 = vmatpush2.msra.mxu0 0.0
      %960 = vmatprep.subr.mxu0 0.0
      %961 = vmatpush2.msra.mxu0 0.0
      %962 = vmatprep.subr.mxu0 0.0
      %963 = vmatpush2.msra.mxu0 0.0
      %964 = vmatprep.subr.mxu0 0.0
      %965 = vmatpush2.msra.mxu0 0.0
      %966 = vmatprep.subr.mxu0 0.0
      %967 = vmatpush2.msra.mxu0 0.0
      %968 = vmatprep.subr.mxu0 0.0
      %969 = vmatpush2.msra.mxu0 0.0
      %970 = vmatprep.subr.mxu0 0.0
      %971 = vmatpush2.msra.mxu0 0.0
      %972 = vmatprep.subr.mxu0 0.0
      %973 = vmatpush2.msra.mxu0 0.0
      %974 = vmatprep.subr.mxu0 0.0
      %975 = vmatpush2.msra.mxu0 0.0
      %976 = vmatprep.subr.mxu0 0.0
      %977 = vmatpush2.msra.mxu0 0.0
      %978 = vmatprep.subr.mxu0 0.0
      %979 = vmatpush2.msra.mxu0 0.0
      %980 = vmatprep.subr.mxu0 0.0
      %981 = vmatpush2.msra.mxu0 0.0
      %982 = vmatprep.subr.mxu0 0.0
      %983 = vmatpush2.msra.mxu0 0.0
      %984 = vmatprep.subr.mxu0 0.0
      %985 = vmatpush2.msra.mxu0 0.0
      %986 = vmatprep.subr.mxu0 0.0
      %987 = vmatpush2.msra.mxu0 0.0
      %988 = vmatprep.mubr.f32.mxu0 0.0
      %989 = vmatmul.mubr.f32.gmra.mxu0 %v922
      %v990 = vpop.f32.mrf.mxu0
      %v991 = vadd.f32 0.0, %v990
      %v992 = vpop.f32.mrf.mxu0
      %993 = vdwg.mxu0
      %v994 = vadd.f32 %v921, %v991
      %v995 = vxor.u32 %v994, 2147483648
      %v996 = vmul.f32 %v995, 1.442695
      %v997 = vpow.pop %v996
      %v998 = vadd.f32 %v997, 1.0
      %v999 = vrcp.pop %v998
      %v1000 = vmul.f32 1.0, %v999
      %v1001 = vtanh.pop %v994
      %v1002 = vmul.f32 %v1000, %v904
      %1004 = vrot.lane.b32.xlu0 %v1001, 96
      %v1005 = vpop.permute.xlu0 %1004
      %v1007 = vmul.f32 %v1000, %v1005
      %1009 = vrot.lane.b32.xlu0 %v1007, 16
      %v1010 = vpop.permute.xlu0 %1009
      %v1012 = vadd.f32 %v1002, %v1010
      %v1013 = vtanh.pop %v1012
      %1015 = vrot.lane.b32.xlu0 %v1013, 32
      %v1016 = vpop.permute.xlu0 %1015
      %v1018 = vmul.f32 %v1000, %v1016
      %1020 = vrot.lane.b32.xlu0 %v1018, 80
      %v1021 = vpop.permute.xlu0 %1020
      %s1023 = scalar_lea.vmem %s245, %s919
      %1024 = vst.msk [vmem:[%s1023] sm:$0x3] %vm376, %v1021
      %s1025 = smul.u32 %s262, 7
      %s1026 = sadd.s32 %s260, %s1025
      %s1027 = smul.u32 %s1026, 2
      %s1028 = scalar_lea.vmem %s222, %s1027
      %v1029 = vld [vmem:[%s1028] sm:$0x3]
      %v1030 = vsel %vm268, %v1021, 0
      %1032 = vmatprep.subr.mxu0 0.0
      %1033 = vmatpush1.msra.mxu0 0.0
      %1034 = vmatprep.subr.mxu0 0.0
      %1035 = vmatpush1.msra.mxu0 0.0
      %1036 = vmatprep.subr.mxu0 0.0
      %1037 = vmatpush1.msra.mxu0 0.0
      %1038 = vmatprep.subr.mxu0 0.0
      %1039 = vmatpush1.msra.mxu0 0.0
      %1040 = vmatprep.subr.mxu0 0.0
      %1041 = vmatpush1.msra.mxu0 0.0
      %1042 = vmatprep.subr.mxu0 0.0
      %1043 = vmatpush1.msra.mxu0 0.0
      %1044 = vmatprep.subr.mxu0 0.0
      %1045 = vmatpush1.msra.mxu0 0.0
      %1046 = vmatprep.subr.mxu0 0.0
      %1047 = vmatpush1.msra.mxu0 0.0
      %1048 = vmatprep.subr.mxu0 0.0
      %1049 = vmatpush1.msra.mxu0 0.0
      %1050 = vmatprep.subr.mxu0 0.0
      %1051 = vmatpush1.msra.mxu0 0.0
      %1052 = vmatprep.subr.mxu0 0.0
      %1053 = vmatpush1.msra.mxu0 0.0
      %1054 = vmatprep.subr.mxu0 0.0
      %1055 = vmatpush1.msra.mxu0 0.0
      %1056 = vmatprep.subr.mxu0 0.0
      %1057 = vmatpush1.msra.mxu0 0.0
      %1058 = vmatprep.subr.mxu0 0.0
      %1059 = vmatpush1.msra.mxu0 0.0
      %1060 = vmatprep.subr.mxu0 0.0
      %1061 = vmatpush1.msra.mxu0 %v259
      %1062 = vmatprep.subr.mxu0 0.0
      %1063 = vmatpush1.msra.mxu0 %v258
      %1064 = vmatprep.subr.mxu0 0.0
      %1065 = vmatpush2.msra.mxu0 0.0
      %1066 = vmatprep.subr.mxu0 0.0
      %1067 = vmatpush2.msra.mxu0 0.0
      %1068 = vmatprep.subr.mxu0 0.0
      %1069 = vmatpush2.msra.mxu0 0.0
      %1070 = vmatprep.subr.mxu0 0.0
      %1071 = vmatpush2.msra.mxu0 0.0
      %1072 = vmatprep.subr.mxu0 0.0
      %1073 = vmatpush2.msra.mxu0 0.0
      %1074 = vmatprep.subr.mxu0 0.0
      %1075 = vmatpush2.msra.mxu0 0.0
      %1076 = vmatprep.subr.mxu0 0.0
      %1077 = vmatpush2.msra.mxu0 0.0
      %1078 = vmatprep.subr.mxu0 0.0
      %1079 = vmatpush2.msra.mxu0 0.0
      %1080 = vmatprep.subr.mxu0 0.0
      %1081 = vmatpush2.msra.mxu0 0.0
      %1082 = vmatprep.subr.mxu0 0.0
      %1083 = vmatpush2.msra.mxu0 0.0
      %1084 = vmatprep.subr.mxu0 0.0
      %1085 = vmatpush2.msra.mxu0 0.0
      %1086 = vmatprep.subr.mxu0 0.0
      %1087 = vmatpush2.msra.mxu0 0.0
      %1088 = vmatprep.subr.mxu0 0.0
      %1089 = vmatpush2.msra.mxu0 0.0
      %1090 = vmatprep.subr.mxu0 0.0
      %1091 = vmatpush2.msra.mxu0 0.0
      %1092 = vmatprep.subr.mxu0 0.0
      %1093 = vmatpush2.msra.mxu0 0.0
      %1094 = vmatprep.subr.mxu0 0.0
      %1095 = vmatpush2.msra.mxu0 0.0
      %1096 = vmatprep.mubr.f32.mxu0 0.0
      %1097 = vmatmul.mubr.f32.gmra.mxu0 %v1030
      %v1098 = vpop.f32.mrf.mxu0
      %v1099 = vadd.f32 0.0, %v1098
      %v1100 = vpop.f32.mrf.mxu0
      %1101 = vdwg.mxu0
      %v1102 = vadd.f32 %v1029, %v1099
      %v1103 = vxor.u32 %v1102, 2147483648
      %v1104 = vmul.f32 %v1103, 1.442695
      %v1105 = vpow.pop %v1104
      %v1106 = vadd.f32 %v1105, 1.0
      %v1107 = vrcp.pop %v1106
      %v1108 = vmul.f32 1.0, %v1107
      %v1109 = vtanh.pop %v1102
      %v1110 = vmul.f32 %v1108, %v1012
      %1112 = vrot.lane.b32.xlu0 %v1109, 96
      %v1113 = vpop.permute.xlu0 %1112
      %v1115 = vmul.f32 %v1108, %v1113
      %1117 = vrot.lane.b32.xlu0 %v1115, 16
      %v1118 = vpop.permute.xlu0 %1117
      %v1120 = vadd.f32 %v1110, %v1118
      %v1121 = vtanh.pop %v1120
      %1123 = vrot.lane.b32.xlu0 %v1121, 32
      %v1124 = vpop.permute.xlu0 %1123
      %v1126 = vmul.f32 %v1108, %v1124
      %1128 = vrot.lane.b32.xlu0 %v1126, 80
      %v1129 = vpop.permute.xlu0 %1128
      %s1131 = scalar_lea.vmem %s245, %s1027
      %1132 = vst.msk [vmem:[%s1131] sm:$0x3] %vm376, %v1129
      %1133 = vst.msk [vmem:[#allocation2] sm:$0x3] %vm376, %v1129
      %1135 = vrot.lane.b32.xlu0 %v1120, 112
      %v1136 = vpop.permute.xlu0 %1135
      %1138 = vst.msk [vmem:[#allocation3] sm:$0x3] %vm376, %v1136
      %s1139 = smul.u32 %s18, 2
      %s1140 = ssub.s32 0, %s1139
      %s1141 = smul.u32 %s17, %s1140
      %s1142 = sadd.s32 %s18, %s1141
      %s1143 = smul.u32 8, %s1142
      %p1144 = scmp.lt.s32.totalorder %s17, 1
      %s1145 = scalar_select %p1144, %s17, 1
      %p1146 = scmp.lt.s32.totalorder %s1143, 7
      %s1147 = scalar_select %p1146, %s1143, 7
      %s1148 = smul.addr %s1145, 8
      %s1149 = sadd.s32 %s1147, %s1148
      %s1150 = smul.addr %s1149, 2
      %s1151 = scalar_lea.vmem %s2, %s1150
      // Predicated region
      $region33: #{base_model_forward.1} parent=27 // pred_check
        %p1152 = pneg %p115
      $region34: #{base_model_forward.1} parent=27 // pred_check_branch
        %1154 = sbr.rel (%p1152) target = $region36
      $region35: #{base_model_forward.1} parent=27 // pred_region
        %s1155 = smul.u32 %s18, 2
        %s1156 = ssub.s32 0, %s1155
        %s1157 = smul.u32 %s17, %s1156
        %s1158 = sadd.s32 %s18, %s1157
        %s1159 = smul.u32 8, %s1158
      $region36: #{base_model_forward.1} parent=27 // pred_fallthru
        _
    $region28: #{base_model_forward.1} parent=5 // pred_fallthru
      _
    %p1160 = scmp.le.s32.totalorder 2, %s8
    // Predicated region
    $region37: #{base_model_forward.1} parent=5 // pred_check
      %p1161 = pneg %p1160
    $region38: #{base_model_forward.1} parent=5 // pred_check_branch
      %1163 = sbr.rel (%p1161) target = $region40
    $region39: #{base_model_forward.1} parent=5 // pred_region
      %s1164 = ssub.s32 %s8, 2
      // Predicated region
      $region41: #{base_model_forward.1} parent=39 // pred_check
        %p1165 = pneg %p121
      $region42: #{base_model_forward.1} parent=39 // pred_check_branch
        %1167 = sbr.rel (%p1165) target = $region44
      $region43: #{base_model_forward.1} parent=39 // pred_region
        %s1168 = smul.u32 %s20, 2
        %s1169 = ssub.s32 0, %s1168
        %s1170 = smul.u32 %s19, %s1169
        %s1171 = sadd.s32 %s20, %s1170
        %s1172 = smul.u32 8, %s1171
        %p1173 = scmp.lt.s32.totalorder %s19, 1
        %s1174 = scalar_select %p1173, %s19, 1
        %p1175 = scmp.lt.s32.totalorder %s1172, 7
        %s1176 = scalar_select %p1175, %s1172, 7
        %s1177 = smul.addr %s1174, 8
        %s1178 = sadd.s32 %s1176, %s1177
        %s1179 = smul.addr %s1178, 2
        %s1180 = scalar_lea.vmem %s2, %s1179
      $region44: #{base_model_forward.1} parent=39 // pred_fallthru
        _
    $region40: #{base_model_forward.1} parent=5 // pred_fallthru
      _
  $region6: #{base_model_forward.1} parent=0 // loop_footer
    %s12 = sadd.s32 1, %s8
  $region7: #{base_model_forward.1} parent=0 // loop_footer_branch
    %7 = sbr.rel target = $region3
  $region8: #{base_model_forward.1} parent=0 // loop_exit
    _

</llo_original>
